<compile_context>
chip_gen: v7x
topology: tpu7x:2x2x1
jax: 0.10.0
libtpu: 0.0.40
codegen_flags: <defaults>
</compile_context>

<pallas_src>
import math
import functools

import jax
import jax.numpy as jnp
from jax.experimental import pallas as pl
from jax.experimental.pallas import tpu as pltpu


def mha_kernel(xq_ref, xkv_ref, wq_ref, wk_ref, wv_ref, wo_ref, b_ref, o_ref,
               q_sc, m_sc, l_sc, acc_sc, *, num_head, head_dim, scale):
    """One (batch, q_tile) pair owns the scratch; kv tiles (innermost axis) accumulate
    with online softmax. Weights (already transposed) are grid-invariant."""
    H, D = num_head, head_dim
    kv = pl.program_id(2)

    @pl.when(kv == 0)
    def _init():
        # Q projection for this query tile (once per q-tile), bf16 operands, f32 accumulate.
        xq = xq_ref[0].astype(jnp.bfloat16)                                   # (tq, F)
        q = jnp.dot(xq, wq_ref[...], preferred_element_type=jnp.float32)
        q = (q + b_ref[0:1]) * scale                                          # fold 1/tau into q
        tq = q.shape[0]
        # head-major layout (H, tq, D) so attention runs as one batched einsum
        q_sc[...] = jnp.transpose(q.reshape(tq, H, D), (1, 0, 2)).astype(jnp.bfloat16)
        m_sc[...] = jnp.full_like(m_sc, -jnp.inf)
        l_sc[...] = jnp.zeros_like(l_sc)
        acc_sc[...] = jnp.zeros_like(acc_sc)

    # K/V projections for this kv tile.
    xkv = xkv_ref[0].astype(jnp.bfloat16)                                     # (tk, F)
    k = jnp.dot(xkv, wk_ref[...], preferred_element_type=jnp.float32) + b_ref[1:2]
    v = jnp.dot(xkv, wv_ref[...], preferred_element_type=jnp.float32) + b_ref[2:3]
    tk = k.shape[0]
    k3 = jnp.transpose(k.reshape(tk, H, D), (1, 0, 2)).astype(jnp.bfloat16)   # (H, tk, D)
    v3 = jnp.transpose(v.reshape(tk, H, D), (1, 0, 2)).astype(jnp.bfloat16)   # (H, tk, D)
    # TODO(synk): value_dropout is identity (eval mode); optional mask / cross_attn not wired.

    # Batched scores over all heads at once; q already carries the 1/tau scale.
    s = jnp.einsum('hqd,hkd->hqk', q_sc[...], k3,
                   preferred_element_type=jnp.float32)                        # (H, tq, tk)

    # Online (flash) softmax update.
    m_prev = m_sc[...]                                                        # (H, tq, 1)
    m_new = jnp.maximum(m_prev, s.max(axis=-1, keepdims=True))
    alpha = jnp.exp(m_prev - m_new)
    p = jnp.exp(s - m_new)
    l_sc[...] = alpha * l_sc[...] + p.sum(axis=-1, keepdims=True)
    acc_sc[...] = alpha * acc_sc[...] + jnp.einsum(
        'hqk,hkd->hqd', p.astype(jnp.bfloat16), v3,
        preferred_element_type=jnp.float32)                                   # (H, tq, D)
    m_sc[...] = m_new

    @pl.when(kv == pl.num_programs(2) - 1)
    def _finalize():
        # Normalize via EUP reciprocal (not a VALU divide), concat heads, output projection.
        attn = acc_sc[...] * pl.reciprocal(l_sc[...], approx=True)            # (H, tq, D) f32
        tq = attn.shape[1]
        concat = jnp.transpose(attn, (1, 0, 2)).reshape(tq, H * D)            # (tq, F)
        out = jnp.dot(concat.astype(jnp.bfloat16), wo_ref[...],
                      preferred_element_type=jnp.float32) + b_ref[3:4]
        o_ref[0] = out.astype(o_ref.dtype)                                    # lane-dense slab


def _pick_tile(n, cap=256):
    """Largest tile <= cap that divides n (multiple of 8 when not the full axis)."""
    if n <= cap:
        return n
    for t in (256, 128, 64, 32, 16, 8):
        if t <= cap and n % t == 0:
            return t
    return n


def multi_head_attention(x, params, *, num_head):
    B, S, F = x.shape
    assert F % num_head == 0
    D = F // num_head
    wq, bq, wk, bk, wv, bv, wo, bo = params

    # Host-side (one-time) prep: transpose weights, cast to bf16, pack biases.
    wqT = wq.T.astype(jnp.bfloat16)
    wkT = wk.T.astype(jnp.bfloat16)
    wvT = wv.T.astype(jnp.bfloat16)
    woT = wo.T.astype(jnp.bfloat16)
    biases = jnp.stack([bq, bk, bv, bo]).astype(jnp.float32)                  # (4, F)

    tq = _pick_tile(S)
    tk = _pick_tile(S)
    grid = (B, S // tq, S // tk)

    kernel = functools.partial(mha_kernel, num_head=num_head, head_dim=D,
                               scale=1.0 / math.sqrt(D))

    # Grid-invariant weights / biases (constant index_map -> fetched once, kept in VMEM).
    w_spec = pl.BlockSpec((F, F), lambda b, qi, ki: (0, 0))
    b_spec = pl.BlockSpec((4, F), lambda b, qi, ki: (0, 0))
    xq_spec = pl.BlockSpec((1, tq, F), lambda b, qi, ki: (b, qi, 0))
    xkv_spec = pl.BlockSpec((1, tk, F), lambda b, qi, ki: (b, ki, 0))
    out_spec = pl.BlockSpec((1, tq, F), lambda b, qi, ki: (b, qi, 0))

    return pl.pallas_call(
        kernel,
        out_shape=jax.ShapeDtypeStruct((B, S, F), x.dtype),
        grid_spec=pltpu.PrefetchScalarGridSpec(
            num_scalar_prefetch=0,
            grid=grid,
            in_specs=[xq_spec, xkv_spec, w_spec, w_spec, w_spec, w_spec, b_spec],
            out_specs=out_spec,
            scratch_shapes=[
                pltpu.VMEM((num_head, tq, D), jnp.bfloat16),   # Q (head-major, pre-scaled)
                pltpu.VMEM((num_head, tq, 1), jnp.float32),    # running max
                pltpu.VMEM((num_head, tq, 1), jnp.float32),    # running denominator
                pltpu.VMEM((num_head, tq, D), jnp.float32),    # output accumulator
            ]),
        compiler_params=pltpu.CompilerParams(
            dimension_semantics=("parallel", "parallel", "arbitrary"),
            vmem_limit_bytes=32 * 1024 * 1024),
    )(x, x, wqT, wkT, wvT, woT, biases)


def xavier_uniform(key, shape):
    fan_out, fan_in = shape
    bound = math.sqrt(6.0 / (fan_in + fan_out))
    return jax.random.uniform(key, shape, jnp.float32, -bound, bound)


def reference_mha(x, params, num_head):
    """Pure-JAX f32 reference mirroring the PyTorch forward (eval mode)."""
    wq, bq, wk, bk, wv, bv, wo, bo = params
    B, S, F = x.shape
    D = F // num_head
    tau = math.sqrt(D)

    def split(t):  # (B,S,F) -> (B,H,S,D)
        return t.reshape(B, S, num_head, D).transpose(0, 2, 1, 3)

    q = split(x @ wq.T + bq)
    k = split(x @ wk.T + bk)
    v = split(x @ wv.T + bv)
    attn = jnp.einsum('bhnd,bhmd->bhnm', q, k) / tau
    p = jax.nn.softmax(attn, axis=-1)
    o = jnp.einsum('bhnm,bhmd->bhnd', p, v)
    o = o.transpose(0, 2, 1, 3).reshape(B, S, F)
    return o @ wo.T + bo


if __name__ == "__main__":
    # Small deterministic example: batch=2, seq=16, feat_dim=128, num_head=4 (head_dim=32).
    B, S, F, H = 2, 16, 128, 4

    key = jax.random.PRNGKey(0)
    kx, kq, kk, kv, ko = jax.random.split(key, 5)

    x = jax.random.normal(kx, (B, S, F), jnp.float32)

    wq = xavier_uniform(kq, (F, F)); bq = jnp.zeros((F,), jnp.float32)
    wk = xavier_uniform(kk, (F, F)); bk = jnp.zeros((F,), jnp.float32)
    wv = xavier_uniform(kv, (F, F)); bv = jnp.zeros((F,), jnp.float32)
    wo = xavier_uniform(ko, (F, F)); bo = jnp.zeros((F,), jnp.float32)
    params = (wq, bq, wk, bk, wv, bv, wo, bo)

    out = multi_head_attention(x, params, num_head=H)
    out = jax.block_until_ready(out)

    ref = reference_mha(x, params, H)
    assert out.shape == (B, S, F)
    # bf16 MXU operands + approx reciprocal -> compare with a modest tolerance.
    assert jnp.allclose(out, ref, atol=5e-2, rtol=5e-2), "mismatch vs reference"

    print("KERNEL_OK")
</pallas_src>

<mosaic_0001>
module attributes {stable_mosaic.version = 11 : i64} {
  func.func @mha_kernel(%arg0: i32, %arg1: i32, %arg2: i32, %arg3: memref<1x16x128xf32, #tpu.memory_space<vmem>>, %arg4: memref<1x16x128xf32, #tpu.memory_space<vmem>>, %arg5: memref<128x128xbf16, #tpu.memory_space<vmem>>, %arg6: memref<128x128xbf16, #tpu.memory_space<vmem>>, %arg7: memref<128x128xbf16, #tpu.memory_space<vmem>>, %arg8: memref<128x128xbf16, #tpu.memory_space<vmem>>, %arg9: memref<4x128xf32, #tpu.memory_space<vmem>>, %arg10: memref<1x16x128xf32, #tpu.memory_space<vmem>>, %arg11: memref<4x16x32xbf16, #tpu.memory_space<vmem>>, %arg12: memref<4x16x1xf32, #tpu.memory_space<vmem>>, %arg13: memref<4x16x1xf32, #tpu.memory_space<vmem>>, %arg14: memref<4x16x32xf32, #tpu.memory_space<vmem>>) attributes {dimension_semantics = [#tpu.dimension_semantics<parallel>, #tpu.dimension_semantics<parallel>, #tpu.dimension_semantics<arbitrary>], iteration_bounds = array<i64: 2, 1, 1>, scalar_prefetch = 0 : i64, scratch_operands = 4 : i64, tpu.core_type = #tpu.core_type<tc>, window_params = [{transform_indices = @transform_0, window_bounds = array<i64: 1, 16, 128>}, {transform_indices = @transform_1, window_bounds = array<i64: 1, 16, 128>}, {pipeline_mode = #tpu.pipeline_mode<synchronous>, transform_indices = @transform_2, window_bounds = array<i64: 128, 128>}, {pipeline_mode = #tpu.pipeline_mode<synchronous>, transform_indices = @transform_3, window_bounds = array<i64: 128, 128>}, {pipeline_mode = #tpu.pipeline_mode<synchronous>, transform_indices = @transform_4, window_bounds = array<i64: 128, 128>}, {pipeline_mode = #tpu.pipeline_mode<synchronous>, transform_indices = @transform_5, window_bounds = array<i64: 128, 128>}, {pipeline_mode = #tpu.pipeline_mode<synchronous>, transform_indices = @transform_6, window_bounds = array<i64: 4, 128>}, {transform_indices = @transform_7, window_bounds = array<i64: 1, 16, 128>}]} {
    %c0_i32 = arith.constant 0 : i32
    %0 = arith.cmpi eq, %arg2, %c0_i32 : i32
    %1 = arith.extui %0 : i1 to i32
    %c0_i32_0 = arith.constant 0 : i32
    %2 = arith.cmpi ne, %1, %c0_i32_0 : i32
    scf.if %2 {
      %c0_37 = arith.constant 0 : index
      %c0_38 = arith.constant 0 : index
      %c0_39 = arith.constant 0 : index
      %50 = vector.load %arg3[%c0_37, %c0_38, %c0_39] : memref<1x16x128xf32, #tpu.memory_space<vmem>>, vector<1x16x128xf32>
      %51 = vector.shape_cast %50 : vector<1x16x128xf32> to vector<16x128xf32>
      %52 = arith.truncf %51 : vector<16x128xf32> to vector<16x128xbf16>
      %c0_40 = arith.constant 0 : index
      %c0_41 = arith.constant 0 : index
      %53 = vector.load %arg5[%c0_40, %c0_41] : memref<128x128xbf16, #tpu.memory_space<vmem>>, vector<128x128xbf16>
      %cst_42 = arith.constant dense<0.000000e+00> : vector<16x128xf32>
      %54 = tpu.matmul %52, %53, %cst_42 {dimension_numbers = #tpu.dot_dimension_numbers<[1], [0], [0], [1], [0, 0, 1, 1], [], []>} : vector<16x128xbf16>, vector<128x128xbf16>, vector<16x128xf32> -> vector<16x128xf32>
      %c0_43 = arith.constant 0 : index
      %c0_44 = arith.constant 0 : index
      %55 = vector.load %arg9[%c0_43, %c0_44] : memref<4x128xf32, #tpu.memory_space<vmem>>, vector<1x128xf32>
      %56 = vector.broadcast %55 : vector<1x128xf32> to vector<16x128xf32>
      %57 = arith.addf %54, %56 : vector<16x128xf32>
      %cst_45 = arith.constant 0.176776692 : f32
      %58 = vector.broadcast %cst_45 : f32 to vector<16x128xf32>
      %59 = arith.mulf %57, %58 : vector<16x128xf32>
      %60 = vector.shape_cast %59 : vector<16x128xf32> to vector<16x4x32xf32>
      %61 = tpu.transpose %60, [1, 0, 2] : vector<16x4x32xf32> -> vector<4x16x32xf32>
      %62 = arith.truncf %61 : vector<4x16x32xf32> to vector<4x16x32xbf16>
      %c0_46 = arith.constant 0 : index
      %c0_47 = arith.constant 0 : index
      %c0_48 = arith.constant 0 : index
      %63 = vector.load %arg11[%c0_46, %c0_47, %c0_48] : memref<4x16x32xbf16, #tpu.memory_space<vmem>>, vector<4x16x32xbf16>
      tpu.vector_store %arg11[%c0_46, %c0_47, %c0_48], %62 {strides = array<i32>} : memref<4x16x32xbf16, #tpu.memory_space<vmem>>, vector<4x16x32xbf16>,
      %cst_49 = arith.constant 0xFF800000 : f32
      %64 = vector.broadcast %cst_49 : f32 to vector<4x16x1xf32>
      %c0_50 = arith.constant 0 : index
      %c0_51 = arith.constant 0 : index
      %c0_52 = arith.constant 0 : index
      %65 = vector.load %arg12[%c0_50, %c0_51, %c0_52] : memref<4x16x1xf32, #tpu.memory_space<vmem>>, vector<4x16x1xf32>
      tpu.vector_store %arg12[%c0_50, %c0_51, %c0_52], %64 {strides = array<i32>} : memref<4x16x1xf32, #tpu.memory_space<vmem>>, vector<4x16x1xf32>,
      %cst_53 = arith.constant 0.000000e+00 : f32
      %66 = vector.broadcast %cst_53 : f32 to vector<4x16x1xf32>
      %c0_54 = arith.constant 0 : index
      %c0_55 = arith.constant 0 : index
      %c0_56 = arith.constant 0 : index
      %67 = vector.load %arg13[%c0_54, %c0_55, %c0_56] : memref<4x16x1xf32, #tpu.memory_space<vmem>>, vector<4x16x1xf32>
      tpu.vector_store %arg13[%c0_54, %c0_55, %c0_56], %66 {strides = array<i32>} : memref<4x16x1xf32, #tpu.memory_space<vmem>>, vector<4x16x1xf32>,
      %cst_57 = arith.constant 0.000000e+00 : f32
      %68 = vector.broadcast %cst_57 : f32 to vector<4x16x32xf32>
      %c0_58 = arith.constant 0 : index
      %c0_59 = arith.constant 0 : index
      %c0_60 = arith.constant 0 : index
      %69 = vector.load %arg14[%c0_58, %c0_59, %c0_60] : memref<4x16x32xf32, #tpu.memory_space<vmem>>, vector<4x16x32xf32>
      tpu.vector_store %arg14[%c0_58, %c0_59, %c0_60], %68 {strides = array<i32>} : memref<4x16x32xf32, #tpu.memory_space<vmem>>, vector<4x16x32xf32>,
    } else {
    }
    %c0 = arith.constant 0 : index
    %c0_1 = arith.constant 0 : index
    %c0_2 = arith.constant 0 : index
    %3 = vector.load %arg4[%c0, %c0_1, %c0_2] : memref<1x16x128xf32, #tpu.memory_space<vmem>>, vector<1x16x128xf32>
    %4 = vector.shape_cast %3 : vector<1x16x128xf32> to vector<16x128xf32>
    %5 = arith.truncf %4 : vector<16x128xf32> to vector<16x128xbf16>
    %c0_3 = arith.constant 0 : index
    %c0_4 = arith.constant 0 : index
    %6 = vector.load %arg6[%c0_3, %c0_4] : memref<128x128xbf16, #tpu.memory_space<vmem>>, vector<128x128xbf16>
    %cst = arith.constant dense<0.000000e+00> : vector<16x128xf32>
    %7 = tpu.matmul %5, %6, %cst {dimension_numbers = #tpu.dot_dimension_numbers<[1], [0], [0], [1], [0, 0, 1, 1], [], []>} : vector<16x128xbf16>, vector<128x128xbf16>, vector<16x128xf32> -> vector<16x128xf32>
    %c1 = arith.constant 1 : index
    %c0_5 = arith.constant 0 : index
    %8 = vector.load %arg9[%c1, %c0_5] : memref<4x128xf32, #tpu.memory_space<vmem>>, vector<1x128xf32>
    %9 = vector.broadcast %8 : vector<1x128xf32> to vector<16x128xf32>
    %10 = arith.addf %7, %9 : vector<16x128xf32>
    %c0_6 = arith.constant 0 : index
    %c0_7 = arith.constant 0 : index
    %11 = vector.load %arg7[%c0_6, %c0_7] : memref<128x128xbf16, #tpu.memory_space<vmem>>, vector<128x128xbf16>
    %cst_8 = arith.constant dense<0.000000e+00> : vector<16x128xf32>
    %12 = tpu.matmul %5, %11, %cst_8 {dimension_numbers = #tpu.dot_dimension_numbers<[1], [0], [0], [1], [0, 0, 1, 1], [], []>} : vector<16x128xbf16>, vector<128x128xbf16>, vector<16x128xf32> -> vector<16x128xf32>
    %c2 = arith.constant 2 : index
    %c0_9 = arith.constant 0 : index
    %13 = vector.load %arg9[%c2, %c0_9] : memref<4x128xf32, #tpu.memory_space<vmem>>, vector<1x128xf32>
    %14 = vector.broadcast %13 : vector<1x128xf32> to vector<16x128xf32>
    %15 = arith.addf %12, %14 : vector<16x128xf32>
    %16 = vector.shape_cast %10 : vector<16x128xf32> to vector<16x4x32xf32>
    %17 = tpu.transpose %16, [1, 0, 2] : vector<16x4x32xf32> -> vector<4x16x32xf32>
    %18 = arith.truncf %17 : vector<4x16x32xf32> to vector<4x16x32xbf16>
    %19 = vector.shape_cast %15 : vector<16x128xf32> to vector<16x4x32xf32>
    %20 = tpu.transpose %19, [1, 0, 2] : vector<16x4x32xf32> -> vector<4x16x32xf32>
    %21 = arith.truncf %20 : vector<4x16x32xf32> to vector<4x16x32xbf16>
    %c0_10 = arith.constant 0 : index
    %c0_11 = arith.constant 0 : index
    %c0_12 = arith.constant 0 : index
    %22 = vector.load %arg11[%c0_10, %c0_11, %c0_12] : memref<4x16x32xbf16, #tpu.memory_space<vmem>>, vector<4x16x32xbf16>
    "tpu.trace_start"() <{level = 10 : i32, message = "hqd,hkd->hqk"}> : () -> ()
    %cst_13 = arith.constant dense<0.000000e+00> : vector<4x16x16xf32>
    %23 = tpu.matmul %22, %18, %cst_13 {dimension_numbers = #tpu.dot_dimension_numbers<[2], [2], [1], [1], [0, 0, 0, 1, 1, 1], [0], [0]>} : vector<4x16x32xbf16>, vector<4x16x32xbf16>, vector<4x16x16xf32> -> vector<4x16x16xf32>
    "tpu.trace_stop"() : () -> ()
    %c0_14 = arith.constant 0 : index
    %c0_15 = arith.constant 0 : index
    %c0_16 = arith.constant 0 : index
    %24 = vector.load %arg12[%c0_14, %c0_15, %c0_16] : memref<4x16x1xf32, #tpu.memory_space<vmem>>, vector<4x16x1xf32>
    %cst_17 = arith.constant dense<0xFF800000> : vector<4x16xf32>
    %25 = vector.multi_reduction <maximumf>, %23, %cst_17 [2] : vector<4x16x16xf32> to vector<4x16xf32>
    %26 = vector.shape_cast %25 : vector<4x16xf32> to vector<4x16x1xf32>
    %27 = arith.maximumf %24, %26 : vector<4x16x1xf32>
    %28 = arith.subf %24, %27 : vector<4x16x1xf32>
    %29 = math.exp %28 : vector<4x16x1xf32>
    %30 = vector.broadcast %27 : vector<4x16x1xf32> to vector<4x16x16xf32>
    %31 = arith.subf %23, %30 : vector<4x16x16xf32>
    %32 = math.exp %31 : vector<4x16x16xf32>
    %c0_18 = arith.constant 0 : index
    %c0_19 = arith.constant 0 : index
    %c0_20 = arith.constant 0 : index
    %33 = vector.load %arg13[%c0_18, %c0_19, %c0_20] : memref<4x16x1xf32, #tpu.memory_space<vmem>>, vector<4x16x1xf32>
    %34 = arith.mulf %29, %33 : vector<4x16x1xf32>
    %cst_21 = arith.constant dense<0.000000e+00> : vector<4x16xf32>
    %35 = vector.multi_reduction <add>, %32, %cst_21 [2] : vector<4x16x16xf32> to vector<4x16xf32>
    %36 = vector.shape_cast %35 : vector<4x16xf32> to vector<4x16x1xf32>
    %37 = arith.addf %34, %36 : vector<4x16x1xf32>
    %c0_22 = arith.constant 0 : index
    %c0_23 = arith.constant 0 : index
    %c0_24 = arith.constant 0 : index
    %38 = vector.load %arg13[%c0_22, %c0_23, %c0_24] : memref<4x16x1xf32, #tpu.memory_space<vmem>>, vector<4x16x1xf32>
    tpu.vector_store %arg13[%c0_22, %c0_23, %c0_24], %37 {strides = array<i32>} : memref<4x16x1xf32, #tpu.memory_space<vmem>>, vector<4x16x1xf32>,
    %c0_25 = arith.constant 0 : index
    %c0_26 = arith.constant 0 : index
    %c0_27 = arith.constant 0 : index
    %39 = vector.load %arg14[%c0_25, %c0_26, %c0_27] : memref<4x16x32xf32, #tpu.memory_space<vmem>>, vector<4x16x32xf32>
    %40 = vector.broadcast %29 : vector<4x16x1xf32> to vector<4x16x32xf32>
    %41 = arith.mulf %40, %39 : vector<4x16x32xf32>
    %42 = arith.truncf %32 : vector<4x16x16xf32> to vector<4x16x16xbf16>
    "tpu.trace_start"() <{level = 10 : i32, message = "hqk,hkd->hqd"}> : () -> ()
    %cst_28 = arith.constant dense<0.000000e+00> : vector<4x16x32xf32>
    %43 = tpu.matmul %42, %21, %cst_28 {dimension_numbers = #tpu.dot_dimension_numbers<[2], [1], [1], [2], [0, 0, 0, 1, 1, 2], [0], [0]>} : vector<4x16x16xbf16>, vector<4x16x32xbf16>, vector<4x16x32xf32> -> vector<4x16x32xf32>
    "tpu.trace_stop"() : () -> ()
    %44 = arith.addf %41, %43 : vector<4x16x32xf32>
    %c0_29 = arith.constant 0 : index
    %c0_30 = arith.constant 0 : index
    %c0_31 = arith.constant 0 : index
    %45 = vector.load %arg14[%c0_29, %c0_30, %c0_31] : memref<4x16x32xf32, #tpu.memory_space<vmem>>, vector<4x16x32xf32>
    tpu.vector_store %arg14[%c0_29, %c0_30, %c0_31], %44 {strides = array<i32>} : memref<4x16x32xf32, #tpu.memory_space<vmem>>, vector<4x16x32xf32>,
    %c0_32 = arith.constant 0 : index
    %c0_33 = arith.constant 0 : index
    %c0_34 = arith.constant 0 : index
    %46 = vector.load %arg12[%c0_32, %c0_33, %c0_34] : memref<4x16x1xf32, #tpu.memory_space<vmem>>, vector<4x16x1xf32>
    tpu.vector_store %arg12[%c0_32, %c0_33, %c0_34], %27 {strides = array<i32>} : memref<4x16x1xf32, #tpu.memory_space<vmem>>, vector<4x16x1xf32>,
    %c0_i32_35 = arith.constant 0 : i32
    %47 = arith.cmpi eq, %arg2, %c0_i32_35 : i32
    %48 = arith.extui %47 : i1 to i32
    %c0_i32_36 = arith.constant 0 : i32
    %49 = arith.cmpi ne, %48, %c0_i32_36 : i32
    scf.if %49 {
      %c0_37 = arith.constant 0 : index
      %c0_38 = arith.constant 0 : index
      %c0_39 = arith.constant 0 : index
      %50 = vector.load %arg14[%c0_37, %c0_38, %c0_39] : memref<4x16x32xf32, #tpu.memory_space<vmem>>, vector<4x16x32xf32>
      %c0_40 = arith.constant 0 : index
      %c0_41 = arith.constant 0 : index
      %c0_42 = arith.constant 0 : index
      %51 = vector.load %arg13[%c0_40, %c0_41, %c0_42] : memref<4x16x1xf32, #tpu.memory_space<vmem>>, vector<4x16x1xf32>
      %52 = tpu.reciprocal %51 {approx = true} : vector<4x16x1xf32> -> vector<4x16x1xf32>
      %53 = vector.broadcast %52 : vector<4x16x1xf32> to vector<4x16x32xf32>
      %54 = arith.mulf %50, %53 : vector<4x16x32xf32>
      %55 = tpu.transpose %54, [1, 0, 2] : vector<4x16x32xf32> -> vector<16x4x32xf32>
      %56 = vector.shape_cast %55 : vector<16x4x32xf32> to vector<16x128xf32>
      %57 = arith.truncf %56 : vector<16x128xf32> to vector<16x128xbf16>
      %c0_43 = arith.constant 0 : index
      %c0_44 = arith.constant 0 : index
      %58 = vector.load %arg8[%c0_43, %c0_44] : memref<128x128xbf16, #tpu.memory_space<vmem>>, vector<128x128xbf16>
      %cst_45 = arith.constant dense<0.000000e+00> : vector<16x128xf32>
      %59 = tpu.matmul %57, %58, %cst_45 {dimension_numbers = #tpu.dot_dimension_numbers<[1], [0], [0], [1], [0, 0, 1, 1], [], []>} : vector<16x128xbf16>, vector<128x128xbf16>, vector<16x128xf32> -> vector<16x128xf32>
      %c3 = arith.constant 3 : index
      %c0_46 = arith.constant 0 : index
      %60 = vector.load %arg9[%c3, %c0_46] : memref<4x128xf32, #tpu.memory_space<vmem>>, vector<1x128xf32>
      %61 = vector.broadcast %60 : vector<1x128xf32> to vector<16x128xf32>
      %62 = arith.addf %59, %61 : vector<16x128xf32>
      %c0_47 = arith.constant 0 : index
      %c0_48 = arith.constant 0 : index
      %c0_49 = arith.constant 0 : index
      %63 = vector.load %arg10[%c0_47, %c0_48, %c0_49] : memref<1x16x128xf32, #tpu.memory_space<vmem>>, vector<1x16x128xf32>
      %64 = vector.shape_cast %63 : vector<1x16x128xf32> to vector<16x128xf32>
      %65 = vector.shape_cast %62 : vector<16x128xf32> to vector<1x16x128xf32>
      tpu.vector_store %arg10[%c0_47, %c0_48, %c0_49], %65 {strides = array<i32>} : memref<1x16x128xf32, #tpu.memory_space<vmem>>, vector<1x16x128xf32>,
    } else {
    }
    return
  }
  func.func @transform_0(%arg0: i32, %arg1: i32, %arg2: i32) -> (i32, i32, i32) {
    %c0_i32 = arith.constant 0 : i32
    %c0_i32_0 = arith.constant 0 : i32
    return %arg0, %arg1, %c0_i32 : i32, i32, i32
  }
  func.func @transform_1(%arg0: i32, %arg1: i32, %arg2: i32) -> (i32, i32, i32) {
    %c0_i32 = arith.constant 0 : i32
    %c0_i32_0 = arith.constant 0 : i32
    return %arg0, %arg2, %c0_i32 : i32, i32, i32
  }
  func.func @transform_2(%arg0: i32, %arg1: i32, %arg2: i32) -> (i32, i32) {
    %c0_i32 = arith.constant 0 : i32
    %c0_i32_0 = arith.constant 0 : i32
    %c0_i32_1 = arith.constant 0 : i32
    return %c0_i32, %c0_i32_0 : i32, i32
  }
  func.func @transform_3(%arg0: i32, %arg1: i32, %arg2: i32) -> (i32, i32) {
    %c0_i32 = arith.constant 0 : i32
    %c0_i32_0 = arith.constant 0 : i32
    %c0_i32_1 = arith.constant 0 : i32
    return %c0_i32, %c0_i32_0 : i32, i32
  }
  func.func @transform_4(%arg0: i32, %arg1: i32, %arg2: i32) -> (i32, i32) {
    %c0_i32 = arith.constant 0 : i32
    %c0_i32_0 = arith.constant 0 : i32
    %c0_i32_1 = arith.constant 0 : i32
    return %c0_i32, %c0_i32_0 : i32, i32
  }
  func.func @transform_5(%arg0: i32, %arg1: i32, %arg2: i32) -> (i32, i32) {
    %c0_i32 = arith.constant 0 : i32
    %c0_i32_0 = arith.constant 0 : i32
    %c0_i32_1 = arith.constant 0 : i32
    return %c0_i32, %c0_i32_0 : i32, i32
  }
  func.func @transform_6(%arg0: i32, %arg1: i32, %arg2: i32) -> (i32, i32) {
    %c0_i32 = arith.constant 0 : i32
    %c0_i32_0 = arith.constant 0 : i32
    %c0_i32_1 = arith.constant 0 : i32
    return %c0_i32, %c0_i32_0 : i32, i32
  }
  func.func @transform_7(%arg0: i32, %arg1: i32, %arg2: i32) -> (i32, i32, i32) {
    %c0_i32 = arith.constant 0 : i32
    %c0_i32_0 = arith.constant 0 : i32
    return %arg0, %arg1, %c0_i32 : i32, i32, i32
  }
}

</mosaic_0001>

<llo_original>
// kernel: tpu_custom_call.1
$region0: #{tpu_custom_call.1}
  #allocation0 [shape = 'u32[]', space=smem, size = 0x4, offset = 0x4, fixed_abs, tag = 'smem constant byte address 0x4 - core index']
  #allocation1 [shape = 'u32[144,128]{1,0:T(1,128)}', space=vmem, size = 0x12000, scoped, tag = 'internal scratch']
  #allocation2 [shape = 'bf16[4,16,32]{2,1,0:T(16,128)(2,1)}', space=vmem, size = 0x4000, scoped, tag = 'scratch operand']
  #allocation3 [shape = 'f32[4,16,1]{2,1,0:T(8,128)}', space=vmem, size = 0x8000, scoped, tag = 'scratch operand']
  #allocation4 [shape = 'f32[4,16,1]{2,1,0:T(8,128)}', space=vmem, size = 0x8000, scoped, tag = 'scratch operand']
  #allocation5 [shape = 'f32[4,16,32]{2,1,0:T(8,128)}', space=vmem, size = 0x8000, scoped, tag = 'scratch operand']
  %s0 = inlined_call_operand.hbm [shape: f32[2,16,128], index: 0, kind: input, shape index: {}]
  %s1 = inlined_call_operand.hbm [shape: f32[2,16,128], index: 1, kind: input, shape index: {}]
  %s2 = inlined_call_operand.hbm [shape: bf16[128,128], index: 2, kind: input, shape index: {}]
  %s3 = inlined_call_operand.hbm [shape: bf16[128,128], index: 3, kind: input, shape index: {}]
  %s4 = inlined_call_operand.hbm [shape: bf16[128,128], index: 4, kind: input, shape index: {}]
  %s5 = inlined_call_operand.hbm [shape: bf16[128,128], index: 5, kind: input, shape index: {}]
  %s6 = inlined_call_operand.vmem [shape: f32[4,128], index: 6, kind: input, shape index: {}]
  %s7 = inlined_call_operand.hbm [shape: f32[2,16,128], index: 7, kind: output, shape index: {}]
  %s8 = sld [smem:[#allocation0]]
  $region93: #{tpu_custom_call.1} parent=0
    _
  %s10 = ssub.s32 1, %s8
  %s11 = scalar_select 0, %s10, %s8
  $region1: #{tpu_custom_call.1} parent=0
    #allocation6 [shape = 'u8[16384]{0}', space=vmem, size = 0x4000, scoped, tag = 'input window, operand 0']
    #allocation7 [shape = 's32[2]{0}', space=sflag, size = 0x8, scoped, tag = 'scoped memory for tpu_custom_call.1']
    #allocation8 [shape = 's32[2]{0}', space=sflag, size = 0x8, scoped, tag = 'scoped memory for tpu_custom_call.1']
    #allocation9 [shape = 'u8[16384]{0}', space=vmem, size = 0x4000, scoped, tag = 'input window, operand 1']
    #allocation10 [shape = 's32[2]{0}', space=sflag, size = 0x8, scoped, tag = 'scoped memory for tpu_custom_call.1']
    #allocation11 [shape = 'u8[32768]{0}', space=vmem, size = 0x8000, scoped, tag = 'input window, operand 2, single buffered']
    #allocation12 [shape = 'u8[32768]{0}', space=vmem, size = 0x8000, scoped, tag = 'input window, operand 3, single buffered']
    #allocation13 [shape = 's32[1]{0}', space=sflag, size = 0x4, scoped, tag = 'scoped memory for tpu_custom_call.1']
    #allocation14 [shape = 'u8[32768]{0}', space=vmem, size = 0x8000, scoped, tag = 'input window, operand 4, single buffered']
    #allocation15 [shape = 'u8[32768]{0}', space=vmem, size = 0x8000, scoped, tag = 'input window, operand 5, single buffered']
    #allocation16 [shape = 's32[1]{0}', space=sflag, size = 0x4, scoped, tag = 'scoped memory for tpu_custom_call.1']
    #allocation17 [shape = 'u8[16384]{0}', space=vmem, size = 0x4000, scoped, tag = 'output window, operand 0']
    %12 = vsyncpa [#allocation7], 0
    %s13 = scalar_lea.sflag [#allocation7], 1
    %14 = vsyncpa %s13, 0
    %15 = vsyncpa [#allocation10], 0
    %s16 = scalar_lea.sflag [#allocation10], 1
    %17 = vsyncpa %s16, 0
    %18 = vsyncpa [#allocation13], 0
    %19 = vsyncpa [#allocation16], 0
    %20 = vsyncpa [#allocation8], 0
    %s21 = scalar_lea.sflag [#allocation8], 1
    %22 = vsyncpa %s21, 0
    loop: start=0, step=1, limit=4
    $region2: #{tpu_custom_call.1} parent=1 // loop_pre_header
      _
    $region3: #{tpu_custom_call.1} parent=1 // loop_header
      %s24 = sphi 0, %s28
      %p25 = scmp.ge.s32.totalorder %s24, 4
      %s31 = sphi 0, %s50
      %s32 = sphi 0, %s46
      %s33 = sphi 0, %s42
      %s34 = sphi 0, %s31
      %s35 = sphi 0, %s32
      %s36 = sphi 0, %s33
      %s37 = sphi 0, %s34
      %s38 = sphi 0, %s35
      %s39 = sphi 0, %s36
      %s55 = sphi 0, %s57
      %s58 = sphi 0, %s55
      %s59 = sphi 0, %s58
      %s75 = sphi 0, %s59
      %s83 = sphi 0, %s85
      %s86 = sphi 0, %s83
      %s87 = sphi 0, %s86
      %s103 = sphi 0, %s87
      %s107 = sphi 0, %s107
      %s109 = sphi 0, %s107
      %s110 = sphi 0, %s109
      %s124 = sphi 0, %s110
      %s128 = sphi 0, %s128
      %s130 = sphi 0, %s128
      %s131 = sphi 0, %s130
      %s145 = sphi 0, %s131
      %s149 = sphi 0, %s149
      %s151 = sphi 0, %s149
      %s152 = sphi 0, %s151
      %s166 = sphi 0, %s152
      %s170 = sphi 0, %s170
      %s172 = sphi 0, %s170
      %s173 = sphi 0, %s172
      %s187 = sphi 0, %s173
      %s191 = sphi 0, %s191
      %s193 = sphi 0, %s191
      %s194 = sphi 0, %s193
      %s208 = sphi 0, %s194
      %s216 = sphi 0, %s218
      %s219 = sphi 0, %s216
      %s220 = sphi 0, %s219
      %s236 = sphi 0, %s220
    $region4: #{tpu_custom_call.1} parent=1 // loop_header_branch
      %27 = sbr.rel (%p25) target = $region8
    $region5: #{tpu_custom_call.1} parent=1 // loop_body
      %s29 = ssub.s32 %s24, 1
      %s30 = ssub.s32 %s24, 2
      %s40 = sadd.s32 1, %s33
      %p41 = scmp.ge.s32.totalorder %s40, 1
      %s42 = scalar_select %p41, 0, %s40
      %s43 = sadd.s32 1, %s32
      %s44 = scalar_select %p41, %s43, %s32
      %p45 = scmp.ge.s32.totalorder %s44, 1
      %s46 = scalar_select %p45, 0, %s44
      %s47 = sadd.s32 1, %s31
      %s48 = scalar_select %p45, %s47, %s31
      %p49 = scmp.ge.s32.totalorder %s48, 2
      %s50 = scalar_select %p49, 0, %s48
      %s51 = ssub.s32 %s31, %s50
      %s52 = ssub.s32 %s32, %s46
      %s53 = sor.u32 %s51, %s52
      %p54 = scmp.eq.s32.totalorder %s53, 0
      %s56 = sadd.s32 %s55, 1
      %s57 = scalar_select %p54, %s55, %s56
      %p60 = pneg %p54
      %p61 = scmp.eq.s32.totalorder %s24, 1
      %p62 = por %p60, %p61
      %p63 = scmp.ne.s32.totalorder %s55, %s58
      %p64 = scmp.eq.s32.totalorder %s24, 0
      %p65 = por %p63, %p64
      %p66 = scmp.ne.s32.totalorder %s55, %s58
      %p67 = scmp.eq.s32.totalorder %s29, 1
      %p68 = por %p66, %p67
      %p69 = scmp.ne.s32.totalorder %s58, %s59
      %p70 = scmp.eq.s32.totalorder %s29, 0
      %p71 = por %p69, %p70
      %p72 = scmp.ne.s32.totalorder %s58, %s59
      %p73 = scmp.eq.s32.totalorder %s30, 1
      %p74 = por %p72, %p73
      %p76 = scmp.ne.s32.totalorder %s59, %s75
      %p77 = scmp.eq.s32.totalorder %s30, 0
      %p78 = por %p76, %p77
      %s79 = ssub.s32 %s31, %s50
      %s80 = ssub.s32 %s33, %s42
      %s81 = sor.u32 %s79, %s80
      %p82 = scmp.eq.s32.totalorder %s81, 0
      %s84 = sadd.s32 %s83, 1
      %s85 = scalar_select %p82, %s83, %s84
      %p88 = pneg %p82
      %p89 = scmp.eq.s32.totalorder %s24, 1
      %p90 = por %p88, %p89
      %p91 = scmp.ne.s32.totalorder %s83, %s86
      %p92 = scmp.eq.s32.totalorder %s24, 0
      %p93 = por %p91, %p92
      %p94 = scmp.ne.s32.totalorder %s83, %s86
      %p95 = scmp.eq.s32.totalorder %s29, 1
      %p96 = por %p94, %p95
      %p97 = scmp.ne.s32.totalorder %s86, %s87
      %p98 = scmp.eq.s32.totalorder %s29, 0
      %p99 = por %p97, %p98
      %p100 = scmp.ne.s32.totalorder %s86, %s87
      %p101 = scmp.eq.s32.totalorder %s30, 1
      %p102 = por %p100, %p101
      %p104 = scmp.ne.s32.totalorder %s87, %s103
      %p105 = scmp.eq.s32.totalorder %s30, 0
      %p106 = por %p104, %p105
      %s108 = sadd.s32 %s107, 1
      %p111 = scmp.eq.s32.totalorder %s24, 1
      %p112 = scmp.ne.s32.totalorder %s107, %s109
      %p113 = scmp.eq.s32.totalorder %s24, 0
      %p114 = por %p112, %p113
      %p115 = scmp.ne.s32.totalorder %s107, %s109
      %p116 = scmp.eq.s32.totalorder %s29, 1
      %p117 = por %p115, %p116
      %p118 = scmp.ne.s32.totalorder %s109, %s110
      %p119 = scmp.eq.s32.totalorder %s29, 0
      %p120 = por %p118, %p119
      %p121 = scmp.ne.s32.totalorder %s109, %s110
      %p122 = scmp.eq.s32.totalorder %s30, 1
      %p123 = por %p121, %p122
      %p125 = scmp.ne.s32.totalorder %s110, %s124
      %p126 = scmp.eq.s32.totalorder %s30, 0
      %p127 = por %p125, %p126
      %s129 = sadd.s32 %s128, 1
      %p132 = scmp.eq.s32.totalorder %s24, 1
      %p133 = scmp.ne.s32.totalorder %s128, %s130
      %p134 = scmp.eq.s32.totalorder %s24, 0
      %p135 = por %p133, %p134
      %p136 = scmp.ne.s32.totalorder %s128, %s130
      %p137 = scmp.eq.s32.totalorder %s29, 1
      %p138 = por %p136, %p137
      %p139 = scmp.ne.s32.totalorder %s130, %s131
      %p140 = scmp.eq.s32.totalorder %s29, 0
      %p141 = por %p139, %p140
      %p142 = scmp.ne.s32.totalorder %s130, %s131
      %p143 = scmp.eq.s32.totalorder %s30, 1
      %p144 = por %p142, %p143
      %p146 = scmp.ne.s32.totalorder %s131, %s145
      %p147 = scmp.eq.s32.totalorder %s30, 0
      %p148 = por %p146, %p147
      %s150 = sadd.s32 %s149, 1
      %p153 = scmp.eq.s32.totalorder %s24, 1
      %p154 = scmp.ne.s32.totalorder %s149, %s151
      %p155 = scmp.eq.s32.totalorder %s24, 0
      %p156 = por %p154, %p155
      %p157 = scmp.ne.s32.totalorder %s149, %s151
      %p158 = scmp.eq.s32.totalorder %s29, 1
      %p159 = por %p157, %p158
      %p160 = scmp.ne.s32.totalorder %s151, %s152
      %p161 = scmp.eq.s32.totalorder %s29, 0
      %p162 = por %p160, %p161
      %p163 = scmp.ne.s32.totalorder %s151, %s152
      %p164 = scmp.eq.s32.totalorder %s30, 1
      %p165 = por %p163, %p164
      %p167 = scmp.ne.s32.totalorder %s152, %s166
      %p168 = scmp.eq.s32.totalorder %s30, 0
      %p169 = por %p167, %p168
      %s171 = sadd.s32 %s170, 1
      %p174 = scmp.eq.s32.totalorder %s24, 1
      %p175 = scmp.ne.s32.totalorder %s170, %s172
      %p176 = scmp.eq.s32.totalorder %s24, 0
      %p177 = por %p175, %p176
      %p178 = scmp.ne.s32.totalorder %s170, %s172
      %p179 = scmp.eq.s32.totalorder %s29, 1
      %p180 = por %p178, %p179
      %p181 = scmp.ne.s32.totalorder %s172, %s173
      %p182 = scmp.eq.s32.totalorder %s29, 0
      %p183 = por %p181, %p182
      %p184 = scmp.ne.s32.totalorder %s172, %s173
      %p185 = scmp.eq.s32.totalorder %s30, 1
      %p186 = por %p184, %p185
      %p188 = scmp.ne.s32.totalorder %s173, %s187
      %p189 = scmp.eq.s32.totalorder %s30, 0
      %p190 = por %p188, %p189
      %s192 = sadd.s32 %s191, 1
      %p195 = scmp.eq.s32.totalorder %s24, 1
      %p196 = scmp.ne.s32.totalorder %s191, %s193
      %p197 = scmp.eq.s32.totalorder %s24, 0
      %p198 = por %p196, %p197
      %p199 = scmp.ne.s32.totalorder %s191, %s193
      %p200 = scmp.eq.s32.totalorder %s29, 1
      %p201 = por %p199, %p200
      %p202 = scmp.ne.s32.totalorder %s193, %s194
      %p203 = scmp.eq.s32.totalorder %s29, 0
      %p204 = por %p202, %p203
      %p205 = scmp.ne.s32.totalorder %s193, %s194
      %p206 = scmp.eq.s32.totalorder %s30, 1
      %p207 = por %p205, %p206
      %p209 = scmp.ne.s32.totalorder %s194, %s208
      %p210 = scmp.eq.s32.totalorder %s30, 0
      %p211 = por %p209, %p210
      %s212 = ssub.s32 %s31, %s50
      %s213 = ssub.s32 %s32, %s46
      %s214 = sor.u32 %s212, %s213
      %p215 = scmp.eq.s32.totalorder %s214, 0
      %s217 = sadd.s32 %s216, 1
      %s218 = scalar_select %p215, %s216, %s217
      %p221 = pneg %p215
      %p222 = scmp.eq.s32.totalorder %s24, 1
      %p223 = por %p221, %p222
      %p224 = scmp.ne.s32.totalorder %s216, %s219
      %p225 = scmp.eq.s32.totalorder %s24, 0
      %p226 = por %p224, %p225
      %p227 = scmp.ne.s32.totalorder %s216, %s219
      %p228 = scmp.eq.s32.totalorder %s29, 1
      %p229 = por %p227, %p228
      %p230 = scmp.ne.s32.totalorder %s219, %s220
      %p231 = scmp.eq.s32.totalorder %s29, 0
      %p232 = por %p230, %p231
      %p233 = scmp.ne.s32.totalorder %s219, %s220
      %p234 = scmp.eq.s32.totalorder %s30, 1
      %p235 = por %p233, %p234
      %p237 = scmp.ne.s32.totalorder %s220, %s236
      %p238 = scmp.eq.s32.totalorder %s30, 0
      %p239 = por %p237, %p238
      %p240 = scmp.le.s32.totalorder 1, %s24
      %p241 = scmp.lt.s32.totalorder %s24, 3
      %p242 = pnand %p240, %p241
      %p243 = pneg %p242
      // Predicated region
      $region9: #{tpu_custom_call.1} parent=5 // pred_check
        _
      $region10: #{tpu_custom_call.1} parent=5 // pred_check_branch
        %245 = sbr.rel (%p242) target = $region12
      $region11: #{tpu_custom_call.1} parent=5 // pred_region
        %s246 = ssub.s32 %s24, 1
        // Predicated region
        $region13: #{tpu_custom_call.1} parent=11 // pred_check
          %p247 = pneg %p120
        $region14: #{tpu_custom_call.1} parent=11 // pred_check_branch
          %249 = sbr.rel (%p247) target = $region16
        $region15: #{tpu_custom_call.1} parent=11 // pred_region
          %s251 = ssub.s32 1024, 1024
          %252 = vsyncadd [#allocation10], %s251
          %s253 = sshll.u32 [#allocation11], 4
          %s254 = int_to_ptr.vmem [resolvable:$true] %s253
          %259 = dma.hbm_to_vmem [thread:$0]  %s2, 1024, %s254, [#allocation10], 64, 64, 4
        $region16: #{tpu_custom_call.1} parent=11 // pred_fallthru
          _
        // Predicated region
        $region17: #{tpu_custom_call.1} parent=11 // pred_check
          %p260 = pneg %p141
        $region18: #{tpu_custom_call.1} parent=11 // pred_check_branch
          %262 = sbr.rel (%p260) target = $region20
        $region19: #{tpu_custom_call.1} parent=11 // pred_region
          %s264 = ssub.s32 1024, 1024
          %265 = vsyncadd [#allocation13], %s264
          %s266 = sshll.u32 [#allocation12], 4
          %s267 = int_to_ptr.vmem [resolvable:$true] %s266
          %272 = dma.hbm_to_vmem [thread:$0]  %s3, 1024, %s267, [#allocation13], 64, 64, 4
        $region20: #{tpu_custom_call.1} parent=11 // pred_fallthru
          _
        // Predicated region
        $region21: #{tpu_custom_call.1} parent=11 // pred_check
          %p273 = pneg %p162
        $region22: #{tpu_custom_call.1} parent=11 // pred_check_branch
          %275 = sbr.rel (%p273) target = $region24
        $region23: #{tpu_custom_call.1} parent=11 // pred_region
          %s277 = ssub.s32 1024, 1024
          %278 = vsyncadd [#allocation13], %s277
          %s279 = sshll.u32 [#allocation14], 4
          %s280 = int_to_ptr.vmem [resolvable:$true] %s279
          %285 = dma.hbm_to_vmem [thread:$0]  %s4, 1024, %s280, [#allocation13], 64, 64, 4
        $region24: #{tpu_custom_call.1} parent=11 // pred_fallthru
          _
        // Predicated region
        $region25: #{tpu_custom_call.1} parent=11 // pred_check
          %p286 = pneg %p183
        $region26: #{tpu_custom_call.1} parent=11 // pred_check_branch
          %288 = sbr.rel (%p286) target = $region28
        $region27: #{tpu_custom_call.1} parent=11 // pred_region
          %s290 = ssub.s32 1024, 1024
          %291 = vsyncadd [#allocation16], %s290
          %s292 = sshll.u32 [#allocation15], 4
          %s293 = int_to_ptr.vmem [resolvable:$true] %s292
          %298 = dma.hbm_to_vmem [thread:$0]  %s5, 1024, %s293, [#allocation16], 64, 64, 4
        $region28: #{tpu_custom_call.1} parent=11 // pred_fallthru
          _
        // Predicated region
        $region29: #{tpu_custom_call.1} parent=11 // pred_check
          %p299 = pneg %p204
        $region30: #{tpu_custom_call.1} parent=11 // pred_check_branch
          %301 = sbr.rel (%p299) target = $region32
        $region31: #{tpu_custom_call.1} parent=11 // pred_region
          _
        $region32: #{tpu_custom_call.1} parent=11 // pred_fallthru
          _
      $region12: #{tpu_custom_call.1} parent=5 // pred_fallthru
        _
      %p302 = scmp.lt.s32.totalorder %s24, 2
      // Predicated region
      $region33: #{tpu_custom_call.1} parent=5 // pred_check
        %p303 = pneg %p302
      $region34: #{tpu_custom_call.1} parent=5 // pred_check_branch
        %305 = sbr.rel (%p303) target = $region36
      $region35: #{tpu_custom_call.1} parent=5 // pred_region
        // Predicated region
        $region37: #{tpu_custom_call.1} parent=35 // pred_check
          %p306 = pneg %p65
        $region38: #{tpu_custom_call.1} parent=35 // pred_check_branch
          %308 = sbr.rel (%p306) target = $region40
        $region39: #{tpu_custom_call.1} parent=35 // pred_region
          %s309 = sand.u32 %s55, 1
          %s310 = scalar_lea.sflag [#allocation7], %s309
          %s311 = sand.u32 %s55, 1
          %s312 = smul.addr %s311, 16
          %s313 = scalar_lea.vmem [#allocation6], %s312
          %s314 = smul.u32 2, %s32
          %s316 = ssub.s32 256, 256
          %317 = vsyncadd %s310, %s316
          %s318 = smul.addr %s31, 2
          %s319 = sadd.s32 %s314, %s318
          %s320 = smul.addr %s319, 128
          %s321 = scalar_lea.hbm %s0, %s320
          %s322 = sshll.u32 %s313, 4
          %s323 = int_to_ptr.vmem [resolvable:$true] %s322
          %328 = dma.hbm_to_vmem [thread:$0]  %s321, 256, %s323, %s310, 128, 128, 8
        $region40: #{tpu_custom_call.1} parent=35 // pred_fallthru
          _
        // Predicated region
        $region41: #{tpu_custom_call.1} parent=35 // pred_check
          %p329 = pneg %p93
        $region42: #{tpu_custom_call.1} parent=35 // pred_check_branch
          %331 = sbr.rel (%p329) target = $region44
        $region43: #{tpu_custom_call.1} parent=35 // pred_region
          %s332 = sand.u32 %s24, 1
          %s333 = scalar_lea.sflag [#allocation10], %s332
          %s334 = sand.u32 %s83, 1
          %s335 = smul.addr %s334, 16
          %s336 = scalar_lea.vmem [#allocation9], %s335
          %s337 = smul.u32 2, %s33
          %s339 = ssub.s32 256, 256
          %340 = vsyncadd %s333, %s339
          %s341 = smul.addr %s31, 2
          %s342 = sadd.s32 %s337, %s341
          %s343 = smul.addr %s342, 128
          %s344 = scalar_lea.hbm %s1, %s343
          %s345 = sshll.u32 %s336, 4
          %s346 = int_to_ptr.vmem [resolvable:$true] %s345
          %351 = dma.hbm_to_vmem [thread:$0]  %s344, 256, %s346, %s333, 128, 128, 8
        $region44: #{tpu_custom_call.1} parent=35 // pred_fallthru
          _
      $region36: #{tpu_custom_call.1} parent=5 // pred_fallthru
        _
      %p352 = scmp.le.s32.totalorder 1, %s24
      %p353 = scmp.lt.s32.totalorder %s24, 3
      %p354 = pnand %p352, %p353
      %p355 = pneg %p354
      // Predicated region
      $region45: #{tpu_custom_call.1} parent=5 // pred_check
        _
      $region46: #{tpu_custom_call.1} parent=5 // pred_check_branch
        %357 = sbr.rel (%p354) target = $region48
      $region47: #{tpu_custom_call.1} parent=5 // pred_region
        %s358 = ssub.s32 %s24, 1
        %s359 = sand.u32 %s58, 1
        %s360 = scalar_lea.sflag [#allocation7], %s359
        %s361 = sand.u32 %s58, 1
        %s362 = smul.addr %s361, 16
        %s363 = scalar_lea.vmem [#allocation6], %s362
        // Predicated region
        $region49: #{tpu_custom_call.1} parent=47 // pred_check
          %p364 = pneg %p71
        $region50: #{tpu_custom_call.1} parent=47 // pred_check_branch
          %366 = sbr.rel (%p364) target = $region52
        $region51: #{tpu_custom_call.1} parent=47 // pred_region
          %367 = dma.done %s360, 256
        $region52: #{tpu_custom_call.1} parent=47 // pred_fallthru
          _
        %s368 = sand.u32 %s29, 1
        %s369 = scalar_lea.sflag [#allocation10], %s368
        %s370 = sand.u32 %s86, 1
        %s371 = smul.addr %s370, 16
        %s372 = scalar_lea.vmem [#allocation9], %s371
        // Predicated region
        $region53: #{tpu_custom_call.1} parent=47 // pred_check
          %p373 = pneg %p99
        $region54: #{tpu_custom_call.1} parent=47 // pred_check_branch
          %375 = sbr.rel (%p373) target = $region56
        $region55: #{tpu_custom_call.1} parent=47 // pred_region
          %376 = dma.done %s369, 256
        $region56: #{tpu_custom_call.1} parent=47 // pred_fallthru
          _
        // Predicated region
        $region57: #{tpu_custom_call.1} parent=47 // pred_check
          %p377 = pneg %p120
        $region58: #{tpu_custom_call.1} parent=47 // pred_check_branch
          %379 = sbr.rel (%p377) target = $region60
        $region59: #{tpu_custom_call.1} parent=47 // pred_region
          %380 = dma.done [#allocation10], 1024
        $region60: #{tpu_custom_call.1} parent=47 // pred_fallthru
          _
        // Predicated region
        $region61: #{tpu_custom_call.1} parent=47 // pred_check
          %p381 = pneg %p141
        $region62: #{tpu_custom_call.1} parent=47 // pred_check_branch
          %383 = sbr.rel (%p381) target = $region64
        $region63: #{tpu_custom_call.1} parent=47 // pred_region
          %384 = dma.done [#allocation13], 1024
        $region64: #{tpu_custom_call.1} parent=47 // pred_fallthru
          _
        // Predicated region
        $region65: #{tpu_custom_call.1} parent=47 // pred_check
          %p385 = pneg %p162
        $region66: #{tpu_custom_call.1} parent=47 // pred_check_branch
          %387 = sbr.rel (%p385) target = $region68
        $region67: #{tpu_custom_call.1} parent=47 // pred_region
          %388 = dma.done [#allocation13], 1024
        $region68: #{tpu_custom_call.1} parent=47 // pred_fallthru
          _
        // Predicated region
        $region69: #{tpu_custom_call.1} parent=47 // pred_check
          %p389 = pneg %p183
        $region70: #{tpu_custom_call.1} parent=47 // pred_check_branch
          %391 = sbr.rel (%p389) target = $region72
        $region71: #{tpu_custom_call.1} parent=47 // pred_region
          %392 = dma.done [#allocation16], 1024
        $region72: #{tpu_custom_call.1} parent=47 // pred_fallthru
          _
        %s393 = sand.u32 %s58, 1
        %s394 = scalar_lea.sflag [#allocation7], %s393
        %s395 = sand.u32 %s58, 1
        %s396 = smul.addr %s395, 16
        %s397 = scalar_lea.vmem [#allocation6], %s396
        %p398 = pneg %p71
        %p399 = pneg %p68
        %s400 = sand.u32 %s29, 1
        %s401 = scalar_lea.sflag [#allocation10], %s400
        %s402 = sand.u32 %s86, 1
        %s403 = smul.addr %s402, 16
        %s404 = scalar_lea.vmem [#allocation9], %s403
        %p405 = pneg %p99
        %p406 = pneg %p96
        %p407 = pneg %p120
        %p408 = pneg %p117
        %p409 = pneg %p141
        %p410 = pneg %p138
        %p411 = pneg %p162
        %p412 = pneg %p159
        %p413 = pneg %p183
        %p414 = pneg %p180
        %p415 = pneg %p204
        %p416 = pneg %p201
        %p417 = pneg %p232
        %p418 = pneg %p229
        %s419 = sand.u32 %s219, 1
        %s420 = scalar_lea.sflag [#allocation8], %s419
        %s421 = sand.u32 %s219, 1
        %s422 = smul.addr %s421, 16
        %s423 = scalar_lea.vmem [#allocation17], %s422
        %s424 = smul.u32 2, %s35
        %s425 = smul.u32 2, %s36
        %s426 = smul.u32 2, %s35
        %p428 = scmp.eq.s32.totalorder %s36, 0
        // Predicated region
        $region73: #{tpu_custom_call.1} parent=47 // pred_check
          %p429 = pneg %p428
        $region74: #{tpu_custom_call.1} parent=47 // pred_check_branch
          %431 = sbr.rel (%p429) target = $region76
        $region75: #{tpu_custom_call.1} parent=47 // pred_region
          %v432 = vld [vmem:[%s363] sm:$0xff]
          %v433 = vld [vmem:[%s363 + $0x8] sm:$0xff]
          %v434 = vpack.c.bf16 %v433, %v432
          %v435 = vld [vmem:[#allocation11] sm:$0xf]
          %v436 = vld [vmem:[#allocation11 + $0x4] sm:$0xf]
          %v437 = vld [vmem:[#allocation11 + $0x8] sm:$0xf]
          %v438 = vld [vmem:[#allocation11 + $0xc] sm:$0xf]
          %v439 = vld [vmem:[#allocation11 + $0x10] sm:$0xf]
          %v440 = vld [vmem:[#allocation11 + $0x14] sm:$0xf]
          %v441 = vld [vmem:[#allocation11 + $0x18] sm:$0xf]
          %v442 = vld [vmem:[#allocation11 + $0x1c] sm:$0xf]
          %v443 = vld [vmem:[#allocation11 + $0x20] sm:$0xf]
          %v444 = vld [vmem:[#allocation11 + $0x24] sm:$0xf]
          %v445 = vld [vmem:[#allocation11 + $0x28] sm:$0xf]
          %v446 = vld [vmem:[#allocation11 + $0x2c] sm:$0xf]
          %v447 = vld [vmem:[#allocation11 + $0x30] sm:$0xf]
          %v448 = vld [vmem:[#allocation11 + $0x34] sm:$0xf]
          %v449 = vld [vmem:[#allocation11 + $0x38] sm:$0xf]
          %v450 = vld [vmem:[#allocation11 + $0x3c] sm:$0xf]
          %v451 = vld [vmem:[%s6] sm:$0x1]
          %v452 = vlaneseq
          %v453 = vshrl.u32 %v452, 7
          %v454 = vsub.s32 0, %v453
          %v455 = vrot.slane %v451, %v454
          %v472 = vunpack.c.l.b16 %v435
          %v473 = vunpack.c.l.b16 %v436
          %v474 = vunpack.c.l.b16 %v437
          %v475 = vunpack.c.l.b16 %v438
          %v476 = vunpack.c.l.b16 %v439
          %v477 = vunpack.c.l.b16 %v440
          %v478 = vunpack.c.l.b16 %v441
          %v479 = vunpack.c.l.b16 %v442
          %v480 = vunpack.c.l.b16 %v443
          %v481 = vunpack.c.l.b16 %v444
          %v482 = vunpack.c.l.b16 %v445
          %v483 = vunpack.c.l.b16 %v446
          %v484 = vunpack.c.l.b16 %v447
          %v485 = vunpack.c.l.b16 %v448
          %v486 = vunpack.c.l.b16 %v449
          %v487 = vunpack.c.l.b16 %v450
          %v488 = vpack.c.b16 %v473, %v472
          %v489 = vpack.c.b16 %v475, %v474
          %v490 = vpack.c.b16 %v477, %v476
          %v491 = vpack.c.b16 %v479, %v478
          %v492 = vpack.c.b16 %v481, %v480
          %v493 = vpack.c.b16 %v483, %v482
          %v494 = vpack.c.b16 %v485, %v484
          %v495 = vpack.c.b16 %v487, %v486
          %504 = vmatprep.subr.bf16.mxu0 0
          %505 = vmatpush1.bf16.msra.mxu0 %v488
          %506 = vmatprep.subr.bf16.mxu0 0
          %507 = vmatpush1.bf16.msra.mxu0 %v489
          %508 = vmatprep.subr.bf16.mxu0 0
          %509 = vmatpush1.bf16.msra.mxu0 %v490
          %510 = vmatprep.subr.bf16.mxu0 0
          %511 = vmatpush1.bf16.msra.mxu0 %v491
          %512 = vmatprep.subr.bf16.mxu0 0
          %513 = vmatpush1.bf16.msra.mxu0 %v492
          %514 = vmatprep.subr.bf16.mxu0 0
          %515 = vmatpush1.bf16.msra.mxu0 %v493
          %516 = vmatprep.subr.bf16.mxu0 0
          %517 = vmatpush1.bf16.msra.mxu0 %v494
          %518 = vmatprep.subr.bf16.mxu0 0
          %519 = vmatpush1.bf16.msra.mxu0 %v495
          %520 = vmatprep.subr.bf16.mxu0 0
          %521 = vmatpush1.bf16.msra.mxu0 0
          %522 = vmatprep.subr.bf16.mxu0 0
          %523 = vmatpush1.bf16.msra.mxu0 0
          %524 = vmatprep.subr.bf16.mxu0 0
          %525 = vmatpush1.bf16.msra.mxu0 0
          %526 = vmatprep.subr.bf16.mxu0 0
          %527 = vmatpush1.bf16.msra.mxu0 0
          %528 = vmatprep.subr.bf16.mxu0 0
          %529 = vmatpush1.bf16.msra.mxu0 0
          %530 = vmatprep.subr.bf16.mxu0 0
          %531 = vmatpush1.bf16.msra.mxu0 0
          %532 = vmatprep.subr.bf16.mxu0 0
          %533 = vmatpush1.bf16.msra.mxu0 0
          %534 = vmatprep.subr.bf16.mxu0 0
          %535 = vmatpush1.bf16.msra.mxu0 0
          %536 = vmatprep.mubr.bf16.mxu0 0
          %537 = vmatmul.mubr.bf16.gmra.mrb[0].mxu0 %v434
          %v538 = vpop.f32.mrb[0].mxu0
          %v539 = vadd.f32 %v455, %v538
          %v540 = vpop.f32.mrb[0].mxu0
          %v541 = vpop.f32.mrb[0].mxu0
          %v542 = vadd.f32 %v455, %v541
          %v543 = vpop.f32.mrb[0].mxu0
          %544 = vdwg.mxu0
          %v545 = vmul.f32 %v539, 0.17677669
          %v546 = vmul.f32 %v542, 0.17677669
          %549 = vrot.lane.b32.xlu0 %v545, 96
          %v550 = vpop.permute.xlu0 %549
          %551 = vrot.lane.b32.xlu0 %v546, 96
          %v552 = vpop.permute.xlu0 %551
          %555 = vrot.lane.b32.xlu0 %v545, 64
          %v556 = vpop.permute.xlu0 %555
          %557 = vrot.lane.b32.xlu0 %v546, 64
          %v558 = vpop.permute.xlu0 %557
          %561 = vrot.lane.b32.xlu0 %v545, 32
          %v562 = vpop.permute.xlu0 %561
          %563 = vrot.lane.b32.xlu0 %v546, 32
          %v564 = vpop.permute.xlu0 %563
          %v567 = vcombine.low %v545, %v556
          %v568 = vcombine.high %v545, %v556
          %v570 = vunpack.c.l.s4 1983009808
          %v571 = vunpack.c.0.s8 %v570
          %v572 = vlaneseq
          %v573 = vshrl.u32 %v572, 7
          %v574 = vsub.s32 %v571, %v573
          %v575 = vrot.slane %v567, %v574
          %v577 = vunpack.c.l.s4 1983009808
          %v578 = vunpack.c.0.s8 %v577
          %v579 = vlaneseq
          %v580 = vshrl.u32 %v579, 7
          %v581 = vsub.s32 %v578, %v580
          %v582 = vrot.slane %v568, %v581
          %v583 = vcombine.low %v550, %v562
          %v584 = vcombine.high %v550, %v562
          %v586 = vunpack.c.l.s4 1983009808
          %v587 = vunpack.c.0.s8 %v586
          %v588 = vlaneseq
          %v589 = vshrl.u32 %v588, 7
          %v590 = vsub.s32 %v587, %v589
          %v591 = vrot.slane %v583, %v590
          %v593 = vunpack.c.l.s4 1983009808
          %v594 = vunpack.c.0.s8 %v593
          %v595 = vlaneseq
          %v596 = vshrl.u32 %v595, 7
          %v597 = vsub.s32 %v594, %v596
          %v598 = vrot.slane %v584, %v597
          %v599 = vcombine.low %v575, %v591
          %v600 = vcombine.high %v575, %v591
          %v602 = vunpack.c.l.s4 1934713408
          %v603 = vunpack.c.0.s8 %v602
          %v604 = vlaneseq
          %v605 = vshrl.u32 %v604, 7
          %v606 = vsub.s32 %v603, %v605
          %v607 = vrot.slane %v599, %v606
          %v609 = vunpack.c.l.s4 1934713408
          %v610 = vunpack.c.0.s8 %v609
          %v611 = vlaneseq
          %v612 = vshrl.u32 %v611, 7
          %v613 = vsub.s32 %v610, %v612
          %v614 = vrot.slane %v600, %v613
          %v615 = vcombine.low %v582, %v598
          %v616 = vcombine.high %v582, %v598
          %v618 = vunpack.c.l.s4 1934713408
          %v619 = vunpack.c.0.s8 %v618
          %v620 = vlaneseq
          %v621 = vshrl.u32 %v620, 7
          %v622 = vsub.s32 %v619, %v621
          %v623 = vrot.slane %v615, %v622
          %v625 = vunpack.c.l.s4 1934713408
          %v626 = vunpack.c.0.s8 %v625
          %v627 = vlaneseq
          %v628 = vshrl.u32 %v627, 7
          %v629 = vsub.s32 %v626, %v628
          %v630 = vrot.slane %v616, %v629
          %v631 = vcombine.high %v607, 0.0
          %v632 = vcombine.high %v614, 0.0
          %v633 = vcombine.high %v623, 0.0
          %v634 = vcombine.high %v630, 0.0
          %v635 = vcombine.low %v546, %v558
          %v636 = vcombine.high %v546, %v558
          %v638 = vunpack.c.l.s4 1983009808
          %v639 = vunpack.c.0.s8 %v638
          %v640 = vlaneseq
          %v641 = vshrl.u32 %v640, 7
          %v642 = vsub.s32 %v639, %v641
          %v643 = vrot.slane %v635, %v642
          %v645 = vunpack.c.l.s4 1983009808
          %v646 = vunpack.c.0.s8 %v645
          %v647 = vlaneseq
          %v648 = vshrl.u32 %v647, 7
          %v649 = vsub.s32 %v646, %v648
          %v650 = vrot.slane %v636, %v649
          %v651 = vcombine.low %v552, %v564
          %v652 = vcombine.high %v552, %v564
          %v654 = vunpack.c.l.s4 1983009808
          %v655 = vunpack.c.0.s8 %v654
          %v656 = vlaneseq
          %v657 = vshrl.u32 %v656, 7
          %v658 = vsub.s32 %v655, %v657
          %v659 = vrot.slane %v651, %v658
          %v661 = vunpack.c.l.s4 1983009808
          %v662 = vunpack.c.0.s8 %v661
          %v663 = vlaneseq
          %v664 = vshrl.u32 %v663, 7
          %v665 = vsub.s32 %v662, %v664
          %v666 = vrot.slane %v652, %v665
          %v667 = vcombine.low %v643, %v659
          %v668 = vcombine.high %v643, %v659
          %v670 = vunpack.c.l.s4 1934713408
          %v671 = vunpack.c.0.s8 %v670
          %v672 = vlaneseq
          %v673 = vshrl.u32 %v672, 7
          %v674 = vsub.s32 %v671, %v673
          %v675 = vrot.slane %v667, %v674
          %v677 = vunpack.c.l.s4 1934713408
          %v678 = vunpack.c.0.s8 %v677
          %v679 = vlaneseq
          %v680 = vshrl.u32 %v679, 7
          %v681 = vsub.s32 %v678, %v680
          %v682 = vrot.slane %v668, %v681
          %v683 = vcombine.low %v650, %v666
          %v684 = vcombine.high %v650, %v666
          %v686 = vunpack.c.l.s4 1934713408
          %v687 = vunpack.c.0.s8 %v686
          %v688 = vlaneseq
          %v689 = vshrl.u32 %v688, 7
          %v690 = vsub.s32 %v687, %v689
          %v691 = vrot.slane %v683, %v690
          %v693 = vunpack.c.l.s4 1934713408
          %v694 = vunpack.c.0.s8 %v693
          %v695 = vlaneseq
          %v696 = vshrl.u32 %v695, 7
          %v697 = vsub.s32 %v694, %v696
          %v698 = vrot.slane %v684, %v697
          %v699 = vcombine.high %v675, 0.0
          %v700 = vcombine.high %v682, 0.0
          %v701 = vcombine.high %v691, 0.0
          %v702 = vcombine.high %v698, 0.0
          %v703 = vcombine.low %v607, %v614
          %v705 = vunpack.c.l.s4 1983009808
          %v706 = vunpack.c.0.s8 %v705
          %v707 = vlaneseq
          %v708 = vshrl.u32 %v707, 7
          %v709 = vsub.s32 %v706, %v708
          %v710 = vrot.slane %v703, %v709
          %v711 = vcombine.low %v631, %v632
          %v713 = vunpack.c.l.s4 1983009808
          %v714 = vunpack.c.0.s8 %v713
          %v715 = vlaneseq
          %v716 = vshrl.u32 %v715, 7
          %v717 = vsub.s32 %v714, %v716
          %v718 = vrot.slane %v711, %v717
          %v719 = vcombine.low %v623, %v630
          %v721 = vunpack.c.l.s4 1983009808
          %v722 = vunpack.c.0.s8 %v721
          %v723 = vlaneseq
          %v724 = vshrl.u32 %v723, 7
          %v725 = vsub.s32 %v722, %v724
          %v726 = vrot.slane %v719, %v725
          %v727 = vcombine.low %v633, %v634
          %v729 = vunpack.c.l.s4 1983009808
          %v730 = vunpack.c.0.s8 %v729
          %v731 = vlaneseq
          %v732 = vshrl.u32 %v731, 7
          %v733 = vsub.s32 %v730, %v732
          %v734 = vrot.slane %v727, %v733
          %v735 = vcombine.low %v710, %v718
          %v736 = vcombine.high %v710, %v718
          %v738 = vunpack.c.l.s4 1934713408
          %v739 = vunpack.c.0.s8 %v738
          %v740 = vlaneseq
          %v741 = vshrl.u32 %v740, 7
          %v742 = vsub.s32 %v739, %v741
          %v743 = vrot.slane %v735, %v742
          %v745 = vunpack.c.l.s4 1934713408
          %v746 = vunpack.c.0.s8 %v745
          %v747 = vlaneseq
          %v748 = vshrl.u32 %v747, 7
          %v749 = vsub.s32 %v746, %v748
          %v750 = vrot.slane %v736, %v749
          %v751 = vcombine.low %v726, %v734
          %v752 = vcombine.high %v726, %v734
          %v754 = vunpack.c.l.s4 1934713408
          %v755 = vunpack.c.0.s8 %v754
          %v756 = vlaneseq
          %v757 = vshrl.u32 %v756, 7
          %v758 = vsub.s32 %v755, %v757
          %v759 = vrot.slane %v751, %v758
          %v761 = vunpack.c.l.s4 1934713408
          %v762 = vunpack.c.0.s8 %v761
          %v763 = vlaneseq
          %v764 = vshrl.u32 %v763, 7
          %v765 = vsub.s32 %v762, %v764
          %v766 = vrot.slane %v752, %v765
          %v767 = vcombine.low %v743, %v759
          %v768 = vcombine.high %v743, %v759
          %v769 = vcombine.low %v750, %v766
          %v770 = vcombine.high %v750, %v766
          %v771 = vcombine.low %v675, %v682
          %v773 = vunpack.c.l.s4 1983009808
          %v774 = vunpack.c.0.s8 %v773
          %v775 = vlaneseq
          %v776 = vshrl.u32 %v775, 7
          %v777 = vsub.s32 %v774, %v776
          %v778 = vrot.slane %v771, %v777
          %v779 = vcombine.low %v699, %v700
          %v781 = vunpack.c.l.s4 1983009808
          %v782 = vunpack.c.0.s8 %v781
          %v783 = vlaneseq
          %v784 = vshrl.u32 %v783, 7
          %v785 = vsub.s32 %v782, %v784
          %v786 = vrot.slane %v779, %v785
          %v787 = vcombine.low %v691, %v698
          %v789 = vunpack.c.l.s4 1983009808
          %v790 = vunpack.c.0.s8 %v789
          %v791 = vlaneseq
          %v792 = vshrl.u32 %v791, 7
          %v793 = vsub.s32 %v790, %v792
          %v794 = vrot.slane %v787, %v793
          %v795 = vcombine.low %v701, %v702
          %v797 = vunpack.c.l.s4 1983009808
          %v798 = vunpack.c.0.s8 %v797
          %v799 = vlaneseq
          %v800 = vshrl.u32 %v799, 7
          %v801 = vsub.s32 %v798, %v800
          %v802 = vrot.slane %v795, %v801
          %v803 = vcombine.low %v778, %v786
          %v804 = vcombine.high %v778, %v786
          %v806 = vunpack.c.l.s4 1934713408
          %v807 = vunpack.c.0.s8 %v806
          %v808 = vlaneseq
          %v809 = vshrl.u32 %v808, 7
          %v810 = vsub.s32 %v807, %v809
          %v811 = vrot.slane %v803, %v810
          %v813 = vunpack.c.l.s4 1934713408
          %v814 = vunpack.c.0.s8 %v813
          %v815 = vlaneseq
          %v816 = vshrl.u32 %v815, 7
          %v817 = vsub.s32 %v814, %v816
          %v818 = vrot.slane %v804, %v817
          %v819 = vcombine.low %v794, %v802
          %v820 = vcombine.high %v794, %v802
          %v822 = vunpack.c.l.s4 1934713408
          %v823 = vunpack.c.0.s8 %v822
          %v824 = vlaneseq
          %v825 = vshrl.u32 %v824, 7
          %v826 = vsub.s32 %v823, %v825
          %v827 = vrot.slane %v819, %v826
          %v829 = vunpack.c.l.s4 1934713408
          %v830 = vunpack.c.0.s8 %v829
          %v831 = vlaneseq
          %v832 = vshrl.u32 %v831, 7
          %v833 = vsub.s32 %v830, %v832
          %v834 = vrot.slane %v820, %v833
          %v835 = vcombine.low %v811, %v827
          %v836 = vcombine.high %v811, %v827
          %v837 = vcombine.low %v818, %v834
          %v838 = vcombine.high %v818, %v834
          %v839 = vpack.c.bf16 %v835, %v767
          %v840 = vpack.c.bf16 %v836, %v768
          %v841 = vpack.c.bf16 %v837, %v769
          %v842 = vpack.c.bf16 %v838, %v770
          %vm843 = vcmask 261120
          %844 = vst.msk [vmem:[#allocation2] sm:$0xff] %vm843, %v839
          %845 = vst.msk [vmem:[#allocation2 + $0x8] sm:$0xff] %vm843, %v840
          %846 = vst.msk [vmem:[#allocation2 + $0x10] sm:$0xff] %vm843, %v841
          %847 = vst.msk [vmem:[#allocation2 + $0x18] sm:$0xff] %vm843, %v842
          %vm848 = vcmask 7168
          %849 = vst.msk [vmem:[#allocation3] sm:$0xff] %vm848, -inf
          %850 = vst.msk [vmem:[#allocation3 + $0x8] sm:$0xff] %vm848, -inf
          %851 = vst.msk [vmem:[#allocation3 + $0x10] sm:$0xff] %vm848, -inf
          %852 = vst.msk [vmem:[#allocation3 + $0x18] sm:$0xff] %vm848, -inf
          %853 = vst.msk [vmem:[#allocation3 + $0x20] sm:$0xff] %vm848, -inf
          %854 = vst.msk [vmem:[#allocation3 + $0x28] sm:$0xff] %vm848, -inf
          %855 = vst.msk [vmem:[#allocation3 + $0x30] sm:$0xff] %vm848, -inf
          %856 = vst.msk [vmem:[#allocation3 + $0x38] sm:$0xff] %vm848, -inf
          %857 = vst.msk [vmem:[#allocation4] sm:$0xff] %vm848, 0.0
          %858 = vst.msk [vmem:[#allocation4 + $0x8] sm:$0xff] %vm848, 0.0
          %859 = vst.msk [vmem:[#allocation4 + $0x10] sm:$0xff] %vm848, 0.0
          %860 = vst.msk [vmem:[#allocation4 + $0x18] sm:$0xff] %vm848, 0.0
          %861 = vst.msk [vmem:[#allocation4 + $0x20] sm:$0xff] %vm848, 0.0
          %862 = vst.msk [vmem:[#allocation4 + $0x28] sm:$0xff] %vm848, 0.0
          %863 = vst.msk [vmem:[#allocation4 + $0x30] sm:$0xff] %vm848, 0.0
          %864 = vst.msk [vmem:[#allocation4 + $0x38] sm:$0xff] %vm848, 0.0
          %865 = vst.msk [vmem:[#allocation5] sm:$0xff] %vm843, 0.0
          %866 = vst.msk [vmem:[#allocation5 + $0x8] sm:$0xff] %vm843, 0.0
          %867 = vst.msk [vmem:[#allocation5 + $0x10] sm:$0xff] %vm843, 0.0
          %868 = vst.msk [vmem:[#allocation5 + $0x18] sm:$0xff] %vm843, 0.0
          %869 = vst.msk [vmem:[#allocation5 + $0x20] sm:$0xff] %vm843, 0.0
          %870 = vst.msk [vmem:[#allocation5 + $0x28] sm:$0xff] %vm843, 0.0
          %871 = vst.msk [vmem:[#allocation5 + $0x30] sm:$0xff] %vm843, 0.0
          %872 = vst.msk [vmem:[#allocation5 + $0x38] sm:$0xff] %vm843, 0.0
        $region76: #{tpu_custom_call.1} parent=47 // pred_fallthru
          _
        %v873 = vld [vmem:[%s372] sm:$0xff]
        %v874 = vld [vmem:[%s372 + $0x8] sm:$0xff]
        %v875 = vpack.c.bf16 %v874, %v873
        %v876 = vld [vmem:[#allocation12] sm:$0xf]
        %v877 = vld [vmem:[#allocation12 + $0x4] sm:$0xf]
        %v878 = vld [vmem:[#allocation12 + $0x8] sm:$0xf]
        %v879 = vld [vmem:[#allocation12 + $0xc] sm:$0xf]
        %v880 = vld [vmem:[#allocation12 + $0x10] sm:$0xf]
        %v881 = vld [vmem:[#allocation12 + $0x14] sm:$0xf]
        %v882 = vld [vmem:[#allocation12 + $0x18] sm:$0xf]
        %v883 = vld [vmem:[#allocation12 + $0x1c] sm:$0xf]
        %v884 = vld [vmem:[#allocation12 + $0x20] sm:$0xf]
        %v885 = vld [vmem:[#allocation12 + $0x24] sm:$0xf]
        %v886 = vld [vmem:[#allocation12 + $0x28] sm:$0xf]
        %v887 = vld [vmem:[#allocation12 + $0x2c] sm:$0xf]
        %v888 = vld [vmem:[#allocation12 + $0x30] sm:$0xf]
        %v889 = vld [vmem:[#allocation12 + $0x34] sm:$0xf]
        %v890 = vld [vmem:[#allocation12 + $0x38] sm:$0xf]
        %v891 = vld [vmem:[#allocation12 + $0x3c] sm:$0xf]
        %v892 = vld [vmem:[%s6 + $0x1] sm:$0x1]
        %v893 = vlaneseq
        %v894 = vshrl.u32 %v893, 7
        %v895 = vsub.s32 0, %v894
        %v896 = vrot.slane %v892, %v895
        %v913 = vunpack.c.l.b16 %v876
        %v914 = vunpack.c.l.b16 %v877
        %v915 = vunpack.c.l.b16 %v878
        %v916 = vunpack.c.l.b16 %v879
        %v917 = vunpack.c.l.b16 %v880
        %v918 = vunpack.c.l.b16 %v881
        %v919 = vunpack.c.l.b16 %v882
        %v920 = vunpack.c.l.b16 %v883
        %v921 = vunpack.c.l.b16 %v884
        %v922 = vunpack.c.l.b16 %v885
        %v923 = vunpack.c.l.b16 %v886
        %v924 = vunpack.c.l.b16 %v887
        %v925 = vunpack.c.l.b16 %v888
        %v926 = vunpack.c.l.b16 %v889
        %v927 = vunpack.c.l.b16 %v890
        %v928 = vunpack.c.l.b16 %v891
        %v929 = vpack.c.b16 %v914, %v913
        %v930 = vpack.c.b16 %v916, %v915
        %v931 = vpack.c.b16 %v918, %v917
        %v932 = vpack.c.b16 %v920, %v919
        %v933 = vpack.c.b16 %v922, %v921
        %v934 = vpack.c.b16 %v924, %v923
        %v935 = vpack.c.b16 %v926, %v925
        %v936 = vpack.c.b16 %v928, %v927
        %945 = vmatprep.subr.bf16.mxu0 0
        %946 = vmatpush1.bf16.msra.mxu0 %v929
        %947 = vmatprep.subr.bf16.mxu0 0
        %948 = vmatpush1.bf16.msra.mxu0 %v930
        %949 = vmatprep.subr.bf16.mxu0 0
        %950 = vmatpush1.bf16.msra.mxu0 %v931
        %951 = vmatprep.subr.bf16.mxu0 0
        %952 = vmatpush1.bf16.msra.mxu0 %v932
        %953 = vmatprep.subr.bf16.mxu0 0
        %954 = vmatpush1.bf16.msra.mxu0 %v933
        %955 = vmatprep.subr.bf16.mxu0 0
        %956 = vmatpush1.bf16.msra.mxu0 %v934
        %957 = vmatprep.subr.bf16.mxu0 0
        %958 = vmatpush1.bf16.msra.mxu0 %v935
        %959 = vmatprep.subr.bf16.mxu0 0
        %960 = vmatpush1.bf16.msra.mxu0 %v936
        %961 = vmatprep.subr.bf16.mxu0 0
        %962 = vmatpush1.bf16.msra.mxu0 0
        %963 = vmatprep.subr.bf16.mxu0 0
        %964 = vmatpush1.bf16.msra.mxu0 0
        %965 = vmatprep.subr.bf16.mxu0 0
        %966 = vmatpush1.bf16.msra.mxu0 0
        %967 = vmatprep.subr.bf16.mxu0 0
        %968 = vmatpush1.bf16.msra.mxu0 0
        %969 = vmatprep.subr.bf16.mxu0 0
        %970 = vmatpush1.bf16.msra.mxu0 0
        %971 = vmatprep.subr.bf16.mxu0 0
        %972 = vmatpush1.bf16.msra.mxu0 0
        %973 = vmatprep.subr.bf16.mxu0 0
        %974 = vmatpush1.bf16.msra.mxu0 0
        %975 = vmatprep.subr.bf16.mxu0 0
        %976 = vmatpush1.bf16.msra.mxu0 0
        %977 = vmatprep.mubr.bf16.mxu0 0
        %978 = vmatmul.mubr.bf16.gmra.mrb[0].mxu0 %v875
        %v979 = vpop.f32.mrb[0].mxu0
        %v980 = vadd.f32 %v896, %v979
        %v981 = vpop.f32.mrb[0].mxu0
        %v982 = vpop.f32.mrb[0].mxu0
        %v983 = vadd.f32 %v896, %v982
        %v984 = vpop.f32.mrb[0].mxu0
        %985 = vdwg.mxu0
        %v986 = vld [vmem:[#allocation14] sm:$0xf]
        %v987 = vld [vmem:[#allocation14 + $0x4] sm:$0xf]
        %v988 = vld [vmem:[#allocation14 + $0x8] sm:$0xf]
        %v989 = vld [vmem:[#allocation14 + $0xc] sm:$0xf]
        %v990 = vld [vmem:[#allocation14 + $0x10] sm:$0xf]
        %v991 = vld [vmem:[#allocation14 + $0x14] sm:$0xf]
        %v992 = vld [vmem:[#allocation14 + $0x18] sm:$0xf]
        %v993 = vld [vmem:[#allocation14 + $0x1c] sm:$0xf]
        %v994 = vld [vmem:[#allocation14 + $0x20] sm:$0xf]
        %v995 = vld [vmem:[#allocation14 + $0x24] sm:$0xf]
        %v996 = vld [vmem:[#allocation14 + $0x28] sm:$0xf]
        %v997 = vld [vmem:[#allocation14 + $0x2c] sm:$0xf]
        %v998 = vld [vmem:[#allocation14 + $0x30] sm:$0xf]
        %v999 = vld [vmem:[#allocation14 + $0x34] sm:$0xf]
        %v1000 = vld [vmem:[#allocation14 + $0x38] sm:$0xf]
        %v1001 = vld [vmem:[#allocation14 + $0x3c] sm:$0xf]
        %v1002 = vld [vmem:[%s6 + $0x2] sm:$0x1]
        %v1003 = vlaneseq
        %v1004 = vshrl.u32 %v1003, 7
        %v1005 = vsub.s32 0, %v1004
        %v1006 = vrot.slane %v1002, %v1005
        %v1023 = vunpack.c.l.b16 %v986
        %v1024 = vunpack.c.l.b16 %v987
        %v1025 = vunpack.c.l.b16 %v988
        %v1026 = vunpack.c.l.b16 %v989
        %v1027 = vunpack.c.l.b16 %v990
        %v1028 = vunpack.c.l.b16 %v991
        %v1029 = vunpack.c.l.b16 %v992
        %v1030 = vunpack.c.l.b16 %v993
        %v1031 = vunpack.c.l.b16 %v994
        %v1032 = vunpack.c.l.b16 %v995
        %v1033 = vunpack.c.l.b16 %v996
        %v1034 = vunpack.c.l.b16 %v997
        %v1035 = vunpack.c.l.b16 %v998
        %v1036 = vunpack.c.l.b16 %v999
        %v1037 = vunpack.c.l.b16 %v1000
        %v1038 = vunpack.c.l.b16 %v1001
        %v1039 = vpack.c.b16 %v1024, %v1023
        %v1040 = vpack.c.b16 %v1026, %v1025
        %v1041 = vpack.c.b16 %v1028, %v1027
        %v1042 = vpack.c.b16 %v1030, %v1029
        %v1043 = vpack.c.b16 %v1032, %v1031
        %v1044 = vpack.c.b16 %v1034, %v1033
        %v1045 = vpack.c.b16 %v1036, %v1035
        %v1046 = vpack.c.b16 %v1038, %v1037
        %1055 = vmatprep.subr.bf16.mxu0 0
        %1056 = vmatpush1.bf16.msra.mxu0 %v1039
        %1057 = vmatprep.subr.bf16.mxu0 0
        %1058 = vmatpush1.bf16.msra.mxu0 %v1040
        %1059 = vmatprep.subr.bf16.mxu0 0
        %1060 = vmatpush1.bf16.msra.mxu0 %v1041
        %1061 = vmatprep.subr.bf16.mxu0 0
        %1062 = vmatpush1.bf16.msra.mxu0 %v1042
        %1063 = vmatprep.subr.bf16.mxu0 0
        %1064 = vmatpush1.bf16.msra.mxu0 %v1043
        %1065 = vmatprep.subr.bf16.mxu0 0
        %1066 = vmatpush1.bf16.msra.mxu0 %v1044
        %1067 = vmatprep.subr.bf16.mxu0 0
        %1068 = vmatpush1.bf16.msra.mxu0 %v1045
        %1069 = vmatprep.subr.bf16.mxu0 0
        %1070 = vmatpush1.bf16.msra.mxu0 %v1046
        %1071 = vmatprep.subr.bf16.mxu0 0
        %1072 = vmatpush1.bf16.msra.mxu0 0
        %1073 = vmatprep.subr.bf16.mxu0 0
        %1074 = vmatpush1.bf16.msra.mxu0 0
        %1075 = vmatprep.subr.bf16.mxu0 0
        %1076 = vmatpush1.bf16.msra.mxu0 0
        %1077 = vmatprep.subr.bf16.mxu0 0
        %1078 = vmatpush1.bf16.msra.mxu0 0
        %1079 = vmatprep.subr.bf16.mxu0 0
        %1080 = vmatpush1.bf16.msra.mxu0 0
        %1081 = vmatprep.subr.bf16.mxu0 0
        %1082 = vmatpush1.bf16.msra.mxu0 0
        %1083 = vmatprep.subr.bf16.mxu0 0
        %1084 = vmatpush1.bf16.msra.mxu0 0
        %1085 = vmatprep.subr.bf16.mxu0 0
        %1086 = vmatpush1.bf16.msra.mxu0 0
        %1087 = vmatprep.mubr.bf16.mxu0 0
        %1088 = vmatmul.mubr.bf16.gmra.mrb[0].mxu0 %v875
        %v1089 = vpop.f32.mrb[0].mxu0
        %v1090 = vadd.f32 %v1006, %v1089
        %v1091 = vpop.f32.mrb[0].mxu0
        %v1092 = vpop.f32.mrb[0].mxu0
        %v1093 = vadd.f32 %v1006, %v1092
        %v1094 = vpop.f32.mrb[0].mxu0
        %1095 = vdwg.mxu0
        %1098 = vrot.lane.b32.xlu0 %v980, 96
        %v1099 = vpop.permute.xlu0 %1098
        %1100 = vrot.lane.b32.xlu0 %v983, 96
        %v1101 = vpop.permute.xlu0 %1100
        %1104 = vrot.lane.b32.xlu0 %v980, 64
        %v1105 = vpop.permute.xlu0 %1104
        %1106 = vrot.lane.b32.xlu0 %v983, 64
        %v1107 = vpop.permute.xlu0 %1106
        %1110 = vrot.lane.b32.xlu0 %v980, 32
        %v1111 = vpop.permute.xlu0 %1110
        %1112 = vrot.lane.b32.xlu0 %v983, 32
        %v1113 = vpop.permute.xlu0 %1112
        %v1116 = vcombine.low %v980, %v1105
        %v1117 = vcombine.high %v980, %v1105
        %v1119 = vunpack.c.l.s4 1983009808
        %v1120 = vunpack.c.0.s8 %v1119
        %v1121 = vlaneseq
        %v1122 = vshrl.u32 %v1121, 7
        %v1123 = vsub.s32 %v1120, %v1122
        %v1124 = vrot.slane %v1116, %v1123
        %v1126 = vunpack.c.l.s4 1983009808
        %v1127 = vunpack.c.0.s8 %v1126
        %v1128 = vlaneseq
        %v1129 = vshrl.u32 %v1128, 7
        %v1130 = vsub.s32 %v1127, %v1129
        %v1131 = vrot.slane %v1117, %v1130
        %v1132 = vcombine.low %v1099, %v1111
        %v1133 = vcombine.high %v1099, %v1111
        %v1135 = vunpack.c.l.s4 1983009808
        %v1136 = vunpack.c.0.s8 %v1135
        %v1137 = vlaneseq
        %v1138 = vshrl.u32 %v1137, 7
        %v1139 = vsub.s32 %v1136, %v1138
        %v1140 = vrot.slane %v1132, %v1139
        %v1142 = vunpack.c.l.s4 1983009808
        %v1143 = vunpack.c.0.s8 %v1142
        %v1144 = vlaneseq
        %v1145 = vshrl.u32 %v1144, 7
        %v1146 = vsub.s32 %v1143, %v1145
        %v1147 = vrot.slane %v1133, %v1146
        %v1148 = vcombine.low %v1124, %v1140
        %v1149 = vcombine.high %v1124, %v1140
        %v1151 = vunpack.c.l.s4 1934713408
        %v1152 = vunpack.c.0.s8 %v1151
        %v1153 = vlaneseq
        %v1154 = vshrl.u32 %v1153, 7
        %v1155 = vsub.s32 %v1152, %v1154
        %v1156 = vrot.slane %v1148, %v1155
        %v1158 = vunpack.c.l.s4 1934713408
        %v1159 = vunpack.c.0.s8 %v1158
        %v1160 = vlaneseq
        %v1161 = vshrl.u32 %v1160, 7
        %v1162 = vsub.s32 %v1159, %v1161
        %v1163 = vrot.slane %v1149, %v1162
        %v1164 = vcombine.low %v1131, %v1147
        %v1165 = vcombine.high %v1131, %v1147
        %v1167 = vunpack.c.l.s4 1934713408
        %v1168 = vunpack.c.0.s8 %v1167
        %v1169 = vlaneseq
        %v1170 = vshrl.u32 %v1169, 7
        %v1171 = vsub.s32 %v1168, %v1170
        %v1172 = vrot.slane %v1164, %v1171
        %v1174 = vunpack.c.l.s4 1934713408
        %v1175 = vunpack.c.0.s8 %v1174
        %v1176 = vlaneseq
        %v1177 = vshrl.u32 %v1176, 7
        %v1178 = vsub.s32 %v1175, %v1177
        %v1179 = vrot.slane %v1165, %v1178
        %v1180 = vcombine.high %v1156, 0.0
        %v1181 = vcombine.high %v1163, 0.0
        %v1182 = vcombine.high %v1172, 0.0
        %v1183 = vcombine.high %v1179, 0.0
        %v1184 = vcombine.low %v983, %v1107
        %v1185 = vcombine.high %v983, %v1107
        %v1187 = vunpack.c.l.s4 1983009808
        %v1188 = vunpack.c.0.s8 %v1187
        %v1189 = vlaneseq
        %v1190 = vshrl.u32 %v1189, 7
        %v1191 = vsub.s32 %v1188, %v1190
        %v1192 = vrot.slane %v1184, %v1191
        %v1194 = vunpack.c.l.s4 1983009808
        %v1195 = vunpack.c.0.s8 %v1194
        %v1196 = vlaneseq
        %v1197 = vshrl.u32 %v1196, 7
        %v1198 = vsub.s32 %v1195, %v1197
        %v1199 = vrot.slane %v1185, %v1198
        %v1200 = vcombine.low %v1101, %v1113
        %v1201 = vcombine.high %v1101, %v1113
        %v1203 = vunpack.c.l.s4 1983009808
        %v1204 = vunpack.c.0.s8 %v1203
        %v1205 = vlaneseq
        %v1206 = vshrl.u32 %v1205, 7
        %v1207 = vsub.s32 %v1204, %v1206
        %v1208 = vrot.slane %v1200, %v1207
        %v1210 = vunpack.c.l.s4 1983009808
        %v1211 = vunpack.c.0.s8 %v1210
        %v1212 = vlaneseq
        %v1213 = vshrl.u32 %v1212, 7
        %v1214 = vsub.s32 %v1211, %v1213
        %v1215 = vrot.slane %v1201, %v1214
        %v1216 = vcombine.low %v1192, %v1208
        %v1217 = vcombine.high %v1192, %v1208
        %v1219 = vunpack.c.l.s4 1934713408
        %v1220 = vunpack.c.0.s8 %v1219
        %v1221 = vlaneseq
        %v1222 = vshrl.u32 %v1221, 7
        %v1223 = vsub.s32 %v1220, %v1222
        %v1224 = vrot.slane %v1216, %v1223
        %v1226 = vunpack.c.l.s4 1934713408
        %v1227 = vunpack.c.0.s8 %v1226
        %v1228 = vlaneseq
        %v1229 = vshrl.u32 %v1228, 7
        %v1230 = vsub.s32 %v1227, %v1229
        %v1231 = vrot.slane %v1217, %v1230
        %v1232 = vcombine.low %v1199, %v1215
        %v1233 = vcombine.high %v1199, %v1215
        %v1235 = vunpack.c.l.s4 1934713408
        %v1236 = vunpack.c.0.s8 %v1235
        %v1237 = vlaneseq
        %v1238 = vshrl.u32 %v1237, 7
        %v1239 = vsub.s32 %v1236, %v1238
        %v1240 = vrot.slane %v1232, %v1239
        %v1242 = vunpack.c.l.s4 1934713408
        %v1243 = vunpack.c.0.s8 %v1242
        %v1244 = vlaneseq
        %v1245 = vshrl.u32 %v1244, 7
        %v1246 = vsub.s32 %v1243, %v1245
        %v1247 = vrot.slane %v1233, %v1246
        %v1248 = vcombine.high %v1224, 0.0
        %v1249 = vcombine.high %v1231, 0.0
        %v1250 = vcombine.high %v1240, 0.0
        %v1251 = vcombine.high %v1247, 0.0
        %v1252 = vcombine.low %v1156, %v1163
        %v1254 = vunpack.c.l.s4 1983009808
        %v1255 = vunpack.c.0.s8 %v1254
        %v1256 = vlaneseq
        %v1257 = vshrl.u32 %v1256, 7
        %v1258 = vsub.s32 %v1255, %v1257
        %v1259 = vrot.slane %v1252, %v1258
        %v1260 = vcombine.low %v1180, %v1181
        %v1262 = vunpack.c.l.s4 1983009808
        %v1263 = vunpack.c.0.s8 %v1262
        %v1264 = vlaneseq
        %v1265 = vshrl.u32 %v1264, 7
        %v1266 = vsub.s32 %v1263, %v1265
        %v1267 = vrot.slane %v1260, %v1266
        %v1268 = vcombine.low %v1172, %v1179
        %v1270 = vunpack.c.l.s4 1983009808
        %v1271 = vunpack.c.0.s8 %v1270
        %v1272 = vlaneseq
        %v1273 = vshrl.u32 %v1272, 7
        %v1274 = vsub.s32 %v1271, %v1273
        %v1275 = vrot.slane %v1268, %v1274
        %v1276 = vcombine.low %v1182, %v1183
        %v1278 = vunpack.c.l.s4 1983009808
        %v1279 = vunpack.c.0.s8 %v1278
        %v1280 = vlaneseq
        %v1281 = vshrl.u32 %v1280, 7
        %v1282 = vsub.s32 %v1279, %v1281
        %v1283 = vrot.slane %v1276, %v1282
        %v1284 = vcombine.low %v1259, %v1267
        %v1285 = vcombine.high %v1259, %v1267
        %v1287 = vunpack.c.l.s4 1934713408
        %v1288 = vunpack.c.0.s8 %v1287
        %v1289 = vlaneseq
        %v1290 = vshrl.u32 %v1289, 7
        %v1291 = vsub.s32 %v1288, %v1290
        %v1292 = vrot.slane %v1284, %v1291
        %v1294 = vunpack.c.l.s4 1934713408
        %v1295 = vunpack.c.0.s8 %v1294
        %v1296 = vlaneseq
        %v1297 = vshrl.u32 %v1296, 7
        %v1298 = vsub.s32 %v1295, %v1297
        %v1299 = vrot.slane %v1285, %v1298
        %v1300 = vcombine.low %v1275, %v1283
        %v1301 = vcombine.high %v1275, %v1283
        %v1303 = vunpack.c.l.s4 1934713408
        %v1304 = vunpack.c.0.s8 %v1303
        %v1305 = vlaneseq
        %v1306 = vshrl.u32 %v1305, 7
        %v1307 = vsub.s32 %v1304, %v1306
        %v1308 = vrot.slane %v1300, %v1307
        %v1310 = vunpack.c.l.s4 1934713408
        %v1311 = vunpack.c.0.s8 %v1310
        %v1312 = vlaneseq
        %v1313 = vshrl.u32 %v1312, 7
        %v1314 = vsub.s32 %v1311, %v1313
        %v1315 = vrot.slane %v1301, %v1314
        %v1316 = vcombine.low %v1292, %v1308
        %v1317 = vcombine.high %v1292, %v1308
        %v1318 = vcombine.low %v1299, %v1315
        %v1319 = vcombine.high %v1299, %v1315
        %v1320 = vcombine.low %v1224, %v1231
        %v1322 = vunpack.c.l.s4 1983009808
        %v1323 = vunpack.c.0.s8 %v1322
        %v1324 = vlaneseq
        %v1325 = vshrl.u32 %v1324, 7
        %v1326 = vsub.s32 %v1323, %v1325
        %v1327 = vrot.slane %v1320, %v1326
        %v1328 = vcombine.low %v1248, %v1249
        %v1330 = vunpack.c.l.s4 1983009808
        %v1331 = vunpack.c.0.s8 %v1330
        %v1332 = vlaneseq
        %v1333 = vshrl.u32 %v1332, 7
        %v1334 = vsub.s32 %v1331, %v1333
        %v1335 = vrot.slane %v1328, %v1334
        %v1336 = vcombine.low %v1240, %v1247
        %v1338 = vunpack.c.l.s4 1983009808
        %v1339 = vunpack.c.0.s8 %v1338
        %v1340 = vlaneseq
        %v1341 = vshrl.u32 %v1340, 7
        %v1342 = vsub.s32 %v1339, %v1341
        %v1343 = vrot.slane %v1336, %v1342
        %v1344 = vcombine.low %v1250, %v1251
        %v1346 = vunpack.c.l.s4 1983009808
        %v1347 = vunpack.c.0.s8 %v1346
        %v1348 = vlaneseq
        %v1349 = vshrl.u32 %v1348, 7
        %v1350 = vsub.s32 %v1347, %v1349
        %v1351 = vrot.slane %v1344, %v1350
        %v1352 = vcombine.low %v1327, %v1335
        %v1353 = vcombine.high %v1327, %v1335
        %v1355 = vunpack.c.l.s4 1934713408
        %v1356 = vunpack.c.0.s8 %v1355
        %v1357 = vlaneseq
        %v1358 = vshrl.u32 %v1357, 7
        %v1359 = vsub.s32 %v1356, %v1358
        %v1360 = vrot.slane %v1352, %v1359
        %v1362 = vunpack.c.l.s4 1934713408
        %v1363 = vunpack.c.0.s8 %v1362
        %v1364 = vlaneseq
        %v1365 = vshrl.u32 %v1364, 7
        %v1366 = vsub.s32 %v1363, %v1365
        %v1367 = vrot.slane %v1353, %v1366
        %v1368 = vcombine.low %v1343, %v1351
        %v1369 = vcombine.high %v1343, %v1351
        %v1371 = vunpack.c.l.s4 1934713408
        %v1372 = vunpack.c.0.s8 %v1371
        %v1373 = vlaneseq
        %v1374 = vshrl.u32 %v1373, 7
        %v1375 = vsub.s32 %v1372, %v1374
        %v1376 = vrot.slane %v1368, %v1375
        %v1378 = vunpack.c.l.s4 1934713408
        %v1379 = vunpack.c.0.s8 %v1378
        %v1380 = vlaneseq
        %v1381 = vshrl.u32 %v1380, 7
        %v1382 = vsub.s32 %v1379, %v1381
        %v1383 = vrot.slane %v1369, %v1382
        %v1384 = vcombine.low %v1360, %v1376
        %v1385 = vcombine.high %v1360, %v1376
        %v1386 = vcombine.low %v1367, %v1383
        %v1387 = vcombine.high %v1367, %v1383
        %v1388 = vpack.c.bf16 %v1384, %v1316
        %v1389 = vpack.c.bf16 %v1385, %v1317
        %v1390 = vpack.c.bf16 %v1386, %v1318
        %v1391 = vpack.c.bf16 %v1387, %v1319
        %1394 = vrot.lane.b32.xlu0 %v1090, 96
        %v1395 = vpop.permute.xlu0 %1394
        %1396 = vrot.lane.b32.xlu0 %v1093, 96
        %v1397 = vpop.permute.xlu0 %1396
        %1400 = vrot.lane.b32.xlu0 %v1090, 64
        %v1401 = vpop.permute.xlu0 %1400
        %1402 = vrot.lane.b32.xlu0 %v1093, 64
        %v1403 = vpop.permute.xlu0 %1402
        %1406 = vrot.lane.b32.xlu0 %v1090, 32
        %v1407 = vpop.permute.xlu0 %1406
        %1408 = vrot.lane.b32.xlu0 %v1093, 32
        %v1409 = vpop.permute.xlu0 %1408
        %v1412 = vcombine.low %v1090, %v1401
        %v1413 = vcombine.high %v1090, %v1401
        %v1415 = vunpack.c.l.s4 1983009808
        %v1416 = vunpack.c.0.s8 %v1415
        %v1417 = vlaneseq
        %v1418 = vshrl.u32 %v1417, 7
        %v1419 = vsub.s32 %v1416, %v1418
        %v1420 = vrot.slane %v1412, %v1419
        %v1422 = vunpack.c.l.s4 1983009808
        %v1423 = vunpack.c.0.s8 %v1422
        %v1424 = vlaneseq
        %v1425 = vshrl.u32 %v1424, 7
        %v1426 = vsub.s32 %v1423, %v1425
        %v1427 = vrot.slane %v1413, %v1426
        %v1428 = vcombine.low %v1395, %v1407
        %v1429 = vcombine.high %v1395, %v1407
        %v1431 = vunpack.c.l.s4 1983009808
        %v1432 = vunpack.c.0.s8 %v1431
        %v1433 = vlaneseq
        %v1434 = vshrl.u32 %v1433, 7
        %v1435 = vsub.s32 %v1432, %v1434
        %v1436 = vrot.slane %v1428, %v1435
        %v1438 = vunpack.c.l.s4 1983009808
        %v1439 = vunpack.c.0.s8 %v1438
        %v1440 = vlaneseq
        %v1441 = vshrl.u32 %v1440, 7
        %v1442 = vsub.s32 %v1439, %v1441
        %v1443 = vrot.slane %v1429, %v1442
        %v1444 = vcombine.low %v1420, %v1436
        %v1445 = vcombine.high %v1420, %v1436
        %v1447 = vunpack.c.l.s4 1934713408
        %v1448 = vunpack.c.0.s8 %v1447
        %v1449 = vlaneseq
        %v1450 = vshrl.u32 %v1449, 7
        %v1451 = vsub.s32 %v1448, %v1450
        %v1452 = vrot.slane %v1444, %v1451
        %v1454 = vunpack.c.l.s4 1934713408
        %v1455 = vunpack.c.0.s8 %v1454
        %v1456 = vlaneseq
        %v1457 = vshrl.u32 %v1456, 7
        %v1458 = vsub.s32 %v1455, %v1457
        %v1459 = vrot.slane %v1445, %v1458
        %v1460 = vcombine.low %v1427, %v1443
        %v1461 = vcombine.high %v1427, %v1443
        %v1463 = vunpack.c.l.s4 1934713408
        %v1464 = vunpack.c.0.s8 %v1463
        %v1465 = vlaneseq
        %v1466 = vshrl.u32 %v1465, 7
        %v1467 = vsub.s32 %v1464, %v1466
        %v1468 = vrot.slane %v1460, %v1467
        %v1470 = vunpack.c.l.s4 1934713408
        %v1471 = vunpack.c.0.s8 %v1470
        %v1472 = vlaneseq
        %v1473 = vshrl.u32 %v1472, 7
        %v1474 = vsub.s32 %v1471, %v1473
        %v1475 = vrot.slane %v1461, %v1474
        %v1476 = vcombine.high %v1452, 0.0
        %v1477 = vcombine.high %v1459, 0.0
        %v1478 = vcombine.high %v1468, 0.0
        %v1479 = vcombine.high %v1475, 0.0
        %v1480 = vcombine.low %v1093, %v1403
        %v1481 = vcombine.high %v1093, %v1403
        %v1483 = vunpack.c.l.s4 1983009808
        %v1484 = vunpack.c.0.s8 %v1483
        %v1485 = vlaneseq
        %v1486 = vshrl.u32 %v1485, 7
        %v1487 = vsub.s32 %v1484, %v1486
        %v1488 = vrot.slane %v1480, %v1487
        %v1490 = vunpack.c.l.s4 1983009808
        %v1491 = vunpack.c.0.s8 %v1490
        %v1492 = vlaneseq
        %v1493 = vshrl.u32 %v1492, 7
        %v1494 = vsub.s32 %v1491, %v1493
        %v1495 = vrot.slane %v1481, %v1494
        %v1496 = vcombine.low %v1397, %v1409
        %v1497 = vcombine.high %v1397, %v1409
        %v1499 = vunpack.c.l.s4 1983009808
        %v1500 = vunpack.c.0.s8 %v1499
        %v1501 = vlaneseq
        %v1502 = vshrl.u32 %v1501, 7
        %v1503 = vsub.s32 %v1500, %v1502
        %v1504 = vrot.slane %v1496, %v1503
        %v1506 = vunpack.c.l.s4 1983009808
        %v1507 = vunpack.c.0.s8 %v1506
        %v1508 = vlaneseq
        %v1509 = vshrl.u32 %v1508, 7
        %v1510 = vsub.s32 %v1507, %v1509
        %v1511 = vrot.slane %v1497, %v1510
        %v1512 = vcombine.low %v1488, %v1504
        %v1513 = vcombine.high %v1488, %v1504
        %v1515 = vunpack.c.l.s4 1934713408
        %v1516 = vunpack.c.0.s8 %v1515
        %v1517 = vlaneseq
        %v1518 = vshrl.u32 %v1517, 7
        %v1519 = vsub.s32 %v1516, %v1518
        %v1520 = vrot.slane %v1512, %v1519
        %v1522 = vunpack.c.l.s4 1934713408
        %v1523 = vunpack.c.0.s8 %v1522
        %v1524 = vlaneseq
        %v1525 = vshrl.u32 %v1524, 7
        %v1526 = vsub.s32 %v1523, %v1525
        %v1527 = vrot.slane %v1513, %v1526
        %v1528 = vcombine.low %v1495, %v1511
        %v1529 = vcombine.high %v1495, %v1511
        %v1531 = vunpack.c.l.s4 1934713408
        %v1532 = vunpack.c.0.s8 %v1531
        %v1533 = vlaneseq
        %v1534 = vshrl.u32 %v1533, 7
        %v1535 = vsub.s32 %v1532, %v1534
        %v1536 = vrot.slane %v1528, %v1535
        %v1538 = vunpack.c.l.s4 1934713408
        %v1539 = vunpack.c.0.s8 %v1538
        %v1540 = vlaneseq
        %v1541 = vshrl.u32 %v1540, 7
        %v1542 = vsub.s32 %v1539, %v1541
        %v1543 = vrot.slane %v1529, %v1542
        %v1544 = vcombine.high %v1520, 0.0
        %v1545 = vcombine.high %v1527, 0.0
        %v1546 = vcombine.high %v1536, 0.0
        %v1547 = vcombine.high %v1543, 0.0
        %v1548 = vcombine.low %v1452, %v1459
        %v1550 = vunpack.c.l.s4 1983009808
        %v1551 = vunpack.c.0.s8 %v1550
        %v1552 = vlaneseq
        %v1553 = vshrl.u32 %v1552, 7
        %v1554 = vsub.s32 %v1551, %v1553
        %v1555 = vrot.slane %v1548, %v1554
        %v1556 = vcombine.low %v1476, %v1477
        %v1558 = vunpack.c.l.s4 1983009808
        %v1559 = vunpack.c.0.s8 %v1558
        %v1560 = vlaneseq
        %v1561 = vshrl.u32 %v1560, 7
        %v1562 = vsub.s32 %v1559, %v1561
        %v1563 = vrot.slane %v1556, %v1562
        %v1564 = vcombine.low %v1468, %v1475
        %v1566 = vunpack.c.l.s4 1983009808
        %v1567 = vunpack.c.0.s8 %v1566
        %v1568 = vlaneseq
        %v1569 = vshrl.u32 %v1568, 7
        %v1570 = vsub.s32 %v1567, %v1569
        %v1571 = vrot.slane %v1564, %v1570
        %v1572 = vcombine.low %v1478, %v1479
        %v1574 = vunpack.c.l.s4 1983009808
        %v1575 = vunpack.c.0.s8 %v1574
        %v1576 = vlaneseq
        %v1577 = vshrl.u32 %v1576, 7
        %v1578 = vsub.s32 %v1575, %v1577
        %v1579 = vrot.slane %v1572, %v1578
        %v1580 = vcombine.low %v1555, %v1563
        %v1581 = vcombine.high %v1555, %v1563
        %v1583 = vunpack.c.l.s4 1934713408
        %v1584 = vunpack.c.0.s8 %v1583
        %v1585 = vlaneseq
        %v1586 = vshrl.u32 %v1585, 7
        %v1587 = vsub.s32 %v1584, %v1586
        %v1588 = vrot.slane %v1580, %v1587
        %v1590 = vunpack.c.l.s4 1934713408
        %v1591 = vunpack.c.0.s8 %v1590
        %v1592 = vlaneseq
        %v1593 = vshrl.u32 %v1592, 7
        %v1594 = vsub.s32 %v1591, %v1593
        %v1595 = vrot.slane %v1581, %v1594
        %v1596 = vcombine.low %v1571, %v1579
        %v1597 = vcombine.high %v1571, %v1579
        %v1599 = vunpack.c.l.s4 1934713408
        %v1600 = vunpack.c.0.s8 %v1599
        %v1601 = vlaneseq
        %v1602 = vshrl.u32 %v1601, 7
        %v1603 = vsub.s32 %v1600, %v1602
        %v1604 = vrot.slane %v1596, %v1603
        %v1606 = vunpack.c.l.s4 1934713408
        %v1607 = vunpack.c.0.s8 %v1606
        %v1608 = vlaneseq
        %v1609 = vshrl.u32 %v1608, 7
        %v1610 = vsub.s32 %v1607, %v1609
        %v1611 = vrot.slane %v1597, %v1610
        %v1612 = vcombine.low %v1588, %v1604
        %v1613 = vcombine.high %v1588, %v1604
        %v1614 = vcombine.low %v1595, %v1611
        %v1615 = vcombine.high %v1595, %v1611
        %v1616 = vcombine.low %v1520, %v1527
        %v1618 = vunpack.c.l.s4 1983009808
        %v1619 = vunpack.c.0.s8 %v1618
        %v1620 = vlaneseq
        %v1621 = vshrl.u32 %v1620, 7
        %v1622 = vsub.s32 %v1619, %v1621
        %v1623 = vrot.slane %v1616, %v1622
        %v1624 = vcombine.low %v1544, %v1545
        %v1626 = vunpack.c.l.s4 1983009808
        %v1627 = vunpack.c.0.s8 %v1626
        %v1628 = vlaneseq
        %v1629 = vshrl.u32 %v1628, 7
        %v1630 = vsub.s32 %v1627, %v1629
        %v1631 = vrot.slane %v1624, %v1630
        %v1632 = vcombine.low %v1536, %v1543
        %v1634 = vunpack.c.l.s4 1983009808
        %v1635 = vunpack.c.0.s8 %v1634
        %v1636 = vlaneseq
        %v1637 = vshrl.u32 %v1636, 7
        %v1638 = vsub.s32 %v1635, %v1637
        %v1639 = vrot.slane %v1632, %v1638
        %v1640 = vcombine.low %v1546, %v1547
        %v1642 = vunpack.c.l.s4 1983009808
        %v1643 = vunpack.c.0.s8 %v1642
        %v1644 = vlaneseq
        %v1645 = vshrl.u32 %v1644, 7
        %v1646 = vsub.s32 %v1643, %v1645
        %v1647 = vrot.slane %v1640, %v1646
        %v1648 = vcombine.low %v1623, %v1631
        %v1649 = vcombine.high %v1623, %v1631
        %v1651 = vunpack.c.l.s4 1934713408
        %v1652 = vunpack.c.0.s8 %v1651
        %v1653 = vlaneseq
        %v1654 = vshrl.u32 %v1653, 7
        %v1655 = vsub.s32 %v1652, %v1654
        %v1656 = vrot.slane %v1648, %v1655
        %v1658 = vunpack.c.l.s4 1934713408
        %v1659 = vunpack.c.0.s8 %v1658
        %v1660 = vlaneseq
        %v1661 = vshrl.u32 %v1660, 7
        %v1662 = vsub.s32 %v1659, %v1661
        %v1663 = vrot.slane %v1649, %v1662
        %v1664 = vcombine.low %v1639, %v1647
        %v1665 = vcombine.high %v1639, %v1647
        %v1667 = vunpack.c.l.s4 1934713408
        %v1668 = vunpack.c.0.s8 %v1667
        %v1669 = vlaneseq
        %v1670 = vshrl.u32 %v1669, 7
        %v1671 = vsub.s32 %v1668, %v1670
        %v1672 = vrot.slane %v1664, %v1671
        %v1674 = vunpack.c.l.s4 1934713408
        %v1675 = vunpack.c.0.s8 %v1674
        %v1676 = vlaneseq
        %v1677 = vshrl.u32 %v1676, 7
        %v1678 = vsub.s32 %v1675, %v1677
        %v1679 = vrot.slane %v1665, %v1678
        %v1680 = vcombine.low %v1656, %v1672
        %v1681 = vcombine.high %v1656, %v1672
        %v1682 = vcombine.low %v1663, %v1679
        %v1683 = vcombine.high %v1663, %v1679
        %v1684 = vpack.c.bf16 %v1680, %v1612
        %v1685 = vpack.c.bf16 %v1681, %v1613
        %v1686 = vpack.c.bf16 %v1682, %v1614
        %v1687 = vpack.c.bf16 %v1683, %v1615
        %v1688 = vld [vmem:[#allocation2] sm:$0xff]
        %v1689 = vld [vmem:[#allocation2 + $0x8] sm:$0xff]
        %v1690 = vld [vmem:[#allocation2 + $0x10] sm:$0xff]
        %v1691 = vld [vmem:[#allocation2 + $0x18] sm:$0xff]
        %vm1692 = vcmask 261120
        %v1694 = vsel %vm1692, %v1688, 0
        %v1697 = vsel %vm1692, %v1388, 0
        %1699 = vmatprep.subr.bf16.mxu0 0
        %1700 = vmatpush1.bf16.xpose.msra.mxu0 %v1697
        %1701 = vmatprep.subr.bf16.mxu0 0
        %1702 = vmatpush1.bf16.xpose.msra.mxu0 0
        %1703 = vmatprep.subr.bf16.mxu0 0
        %1704 = vmatpush1.bf16.xpose.msra.mxu0 0
        %1705 = vmatprep.subr.bf16.mxu0 0
        %1706 = vmatpush1.bf16.xpose.msra.mxu0 0
        %1707 = vmatprep.subr.bf16.mxu0 0
        %1708 = vmatpush1.bf16.xpose.msra.mxu0 0
        %1709 = vmatprep.subr.bf16.mxu0 0
        %1710 = vmatpush1.bf16.xpose.msra.mxu0 0
        %1711 = vmatprep.subr.bf16.mxu0 0
        %1712 = vmatpush1.bf16.xpose.msra.mxu0 0
        %1713 = vmatprep.subr.bf16.mxu0 0
        %1714 = vmatpush1.bf16.xpose.msra.mxu0 0
        %1715 = vmatprep.subr.bf16.mxu0 0
        %1716 = vmatpush1.bf16.xpose.msra.mxu0 0
        %1717 = vmatprep.subr.bf16.mxu0 0
        %1718 = vmatpush1.bf16.xpose.msra.mxu0 0
        %1719 = vmatprep.subr.bf16.mxu0 0
        %1720 = vmatpush1.bf16.xpose.msra.mxu0 0
        %1721 = vmatprep.subr.bf16.mxu0 0
        %1722 = vmatpush1.bf16.xpose.msra.mxu0 0
        %1723 = vmatprep.subr.bf16.mxu0 0
        %1724 = vmatpush1.bf16.xpose.msra.mxu0 0
        %1725 = vmatprep.subr.bf16.mxu0 0
        %1726 = vmatpush1.bf16.xpose.msra.mxu0 0
        %1727 = vmatprep.subr.bf16.mxu0 0
        %1728 = vmatpush1.bf16.xpose.msra.mxu0 0
        %1729 = vmatprep.subr.bf16.mxu0 0
        %1730 = vmatpush1.bf16.xpose.msra.mxu0 0
        %1731 = vmatprep.mubr.bf16.mxu0 0
        %1732 = vmatmul.mubr.bf16.gmra.mrb[0].mxu0 %v1694
        %v1733 = vpop.f32.mrb[0].mxu0
        %v1734 = vadd.f32 0.0, %v1733
        %v1735 = vpop.f32.mrb[0].mxu0
        %v1736 = vpop.f32.mrb[0].mxu0
        %v1737 = vadd.f32 0.0, %v1736
        %v1738 = vpop.f32.mrb[0].mxu0
        %1739 = vdwg.mxu0
        %v1741 = vsel %vm1692, %v1689, 0
        %v1744 = vsel %vm1692, %v1389, 0
        %1746 = vmatprep.subr.bf16.mxu0 0
        %1747 = vmatpush1.bf16.xpose.msra.mxu0 %v1744
        %1748 = vmatprep.subr.bf16.mxu0 0
        %1749 = vmatpush1.bf16.xpose.msra.mxu0 0
        %1750 = vmatprep.subr.bf16.mxu0 0
        %1751 = vmatpush1.bf16.xpose.msra.mxu0 0
        %1752 = vmatprep.subr.bf16.mxu0 0
        %1753 = vmatpush1.bf16.xpose.msra.mxu0 0
        %1754 = vmatprep.subr.bf16.mxu0 0
        %1755 = vmatpush1.bf16.xpose.msra.mxu0 0
        %1756 = vmatprep.subr.bf16.mxu0 0
        %1757 = vmatpush1.bf16.xpose.msra.mxu0 0
        %1758 = vmatprep.subr.bf16.mxu0 0
        %1759 = vmatpush1.bf16.xpose.msra.mxu0 0
        %1760 = vmatprep.subr.bf16.mxu0 0
        %1761 = vmatpush1.bf16.xpose.msra.mxu0 0
        %1762 = vmatprep.subr.bf16.mxu0 0
        %1763 = vmatpush1.bf16.xpose.msra.mxu0 0
        %1764 = vmatprep.subr.bf16.mxu0 0
        %1765 = vmatpush1.bf16.xpose.msra.mxu0 0
        %1766 = vmatprep.subr.bf16.mxu0 0
        %1767 = vmatpush1.bf16.xpose.msra.mxu0 0
        %1768 = vmatprep.subr.bf16.mxu0 0
        %1769 = vmatpush1.bf16.xpose.msra.mxu0 0
        %1770 = vmatprep.subr.bf16.mxu0 0
        %1771 = vmatpush1.bf16.xpose.msra.mxu0 0
        %1772 = vmatprep.subr.bf16.mxu0 0
        %1773 = vmatpush1.bf16.xpose.msra.mxu0 0
        %1774 = vmatprep.subr.bf16.mxu0 0
        %1775 = vmatpush1.bf16.xpose.msra.mxu0 0
        %1776 = vmatprep.subr.bf16.mxu0 0
        %1777 = vmatpush1.bf16.xpose.msra.mxu0 0
        %1778 = vmatprep.mubr.bf16.mxu0 0
        %1779 = vmatmul.mubr.bf16.gmra.mrb[0].mxu0 %v1741
        %v1780 = vpop.f32.mrb[0].mxu0
        %v1781 = vadd.f32 0.0, %v1780
        %v1782 = vpop.f32.mrb[0].mxu0
        %v1783 = vpop.f32.mrb[0].mxu0
        %v1784 = vadd.f32 0.0, %v1783
        %v1785 = vpop.f32.mrb[0].mxu0
        %1786 = vdwg.mxu0
        %v1788 = vsel %vm1692, %v1690, 0
        %v1791 = vsel %vm1692, %v1390, 0
        %1793 = vmatprep.subr.bf16.mxu0 0
        %1794 = vmatpush1.bf16.xpose.msra.mxu0 %v1791
        %1795 = vmatprep.subr.bf16.mxu0 0
        %1796 = vmatpush1.bf16.xpose.msra.mxu0 0
        %1797 = vmatprep.subr.bf16.mxu0 0
        %1798 = vmatpush1.bf16.xpose.msra.mxu0 0
        %1799 = vmatprep.subr.bf16.mxu0 0
        %1800 = vmatpush1.bf16.xpose.msra.mxu0 0
        %1801 = vmatprep.subr.bf16.mxu0 0
        %1802 = vmatpush1.bf16.xpose.msra.mxu0 0
        %1803 = vmatprep.subr.bf16.mxu0 0
        %1804 = vmatpush1.bf16.xpose.msra.mxu0 0
        %1805 = vmatprep.subr.bf16.mxu0 0
        %1806 = vmatpush1.bf16.xpose.msra.mxu0 0
        %1807 = vmatprep.subr.bf16.mxu0 0
        %1808 = vmatpush1.bf16.xpose.msra.mxu0 0
        %1809 = vmatprep.subr.bf16.mxu0 0
        %1810 = vmatpush1.bf16.xpose.msra.mxu0 0
        %1811 = vmatprep.subr.bf16.mxu0 0
        %1812 = vmatpush1.bf16.xpose.msra.mxu0 0
        %1813 = vmatprep.subr.bf16.mxu0 0
        %1814 = vmatpush1.bf16.xpose.msra.mxu0 0
        %1815 = vmatprep.subr.bf16.mxu0 0
        %1816 = vmatpush1.bf16.xpose.msra.mxu0 0
        %1817 = vmatprep.subr.bf16.mxu0 0
        %1818 = vmatpush1.bf16.xpose.msra.mxu0 0
        %1819 = vmatprep.subr.bf16.mxu0 0
        %1820 = vmatpush1.bf16.xpose.msra.mxu0 0
        %1821 = vmatprep.subr.bf16.mxu0 0
        %1822 = vmatpush1.bf16.xpose.msra.mxu0 0
        %1823 = vmatprep.subr.bf16.mxu0 0
        %1824 = vmatpush1.bf16.xpose.msra.mxu0 0
        %1825 = vmatprep.mubr.bf16.mxu0 0
        %1826 = vmatmul.mubr.bf16.gmra.mrb[0].mxu0 %v1788
        %v1827 = vpop.f32.mrb[0].mxu0
        %v1828 = vadd.f32 0.0, %v1827
        %v1829 = vpop.f32.mrb[0].mxu0
        %v1830 = vpop.f32.mrb[0].mxu0
        %v1831 = vadd.f32 0.0, %v1830
        %v1832 = vpop.f32.mrb[0].mxu0
        %1833 = vdwg.mxu0
        %v1835 = vsel %vm1692, %v1691, 0
        %v1838 = vsel %vm1692, %v1391, 0
        %1840 = vmatprep.subr.bf16.mxu0 0
        %1841 = vmatpush1.bf16.xpose.msra.mxu0 %v1838
        %1842 = vmatprep.subr.bf16.mxu0 0
        %1843 = vmatpush1.bf16.xpose.msra.mxu0 0
        %1844 = vmatprep.subr.bf16.mxu0 0
        %1845 = vmatpush1.bf16.xpose.msra.mxu0 0
        %1846 = vmatprep.subr.bf16.mxu0 0
        %1847 = vmatpush1.bf16.xpose.msra.mxu0 0
        %1848 = vmatprep.subr.bf16.mxu0 0
        %1849 = vmatpush1.bf16.xpose.msra.mxu0 0
        %1850 = vmatprep.subr.bf16.mxu0 0
        %1851 = vmatpush1.bf16.xpose.msra.mxu0 0
        %1852 = vmatprep.subr.bf16.mxu0 0
        %1853 = vmatpush1.bf16.xpose.msra.mxu0 0
        %1854 = vmatprep.subr.bf16.mxu0 0
        %1855 = vmatpush1.bf16.xpose.msra.mxu0 0
        %1856 = vmatprep.subr.bf16.mxu0 0
        %1857 = vmatpush1.bf16.xpose.msra.mxu0 0
        %1858 = vmatprep.subr.bf16.mxu0 0
        %1859 = vmatpush1.bf16.xpose.msra.mxu0 0
        %1860 = vmatprep.subr.bf16.mxu0 0
        %1861 = vmatpush1.bf16.xpose.msra.mxu0 0
        %1862 = vmatprep.subr.bf16.mxu0 0
        %1863 = vmatpush1.bf16.xpose.msra.mxu0 0
        %1864 = vmatprep.subr.bf16.mxu0 0
        %1865 = vmatpush1.bf16.xpose.msra.mxu0 0
        %1866 = vmatprep.subr.bf16.mxu0 0
        %1867 = vmatpush1.bf16.xpose.msra.mxu0 0
        %1868 = vmatprep.subr.bf16.mxu0 0
        %1869 = vmatpush1.bf16.xpose.msra.mxu0 0
        %1870 = vmatprep.subr.bf16.mxu0 0
        %1871 = vmatpush1.bf16.xpose.msra.mxu0 0
        %1872 = vmatprep.mubr.bf16.mxu0 0
        %1873 = vmatmul.mubr.bf16.gmra.mrb[0].mxu0 %v1835
        %v1874 = vpop.f32.mrb[0].mxu0
        %v1875 = vadd.f32 0.0, %v1874
        %v1876 = vpop.f32.mrb[0].mxu0
        %v1877 = vpop.f32.mrb[0].mxu0
        %v1878 = vadd.f32 0.0, %v1877
        %v1879 = vpop.f32.mrb[0].mxu0
        %1880 = vdwg.mxu0
        %v1881 = vld [vmem:[#allocation3] sm:$0xff]
        %v1882 = vld [vmem:[#allocation3 + $0x8] sm:$0xff]
        %v1883 = vld [vmem:[#allocation3 + $0x10] sm:$0xff]
        %v1884 = vld [vmem:[#allocation3 + $0x18] sm:$0xff]
        %v1885 = vld [vmem:[#allocation3 + $0x20] sm:$0xff]
        %v1886 = vld [vmem:[#allocation3 + $0x28] sm:$0xff]
        %v1887 = vld [vmem:[#allocation3 + $0x30] sm:$0xff]
        %v1888 = vld [vmem:[#allocation3 + $0x38] sm:$0xff]
        %vm1889 = vcmask 130048
        %v1890 = vsel %vm1889, %v1734, -inf
        %1891 = vmax.xlane.f32.xlu0 %v1890
        %v1892 = vpop.xlane.xlu0 %1891
        %v1893 = vsel %vm1889, %v1737, -inf
        %1894 = vmax.xlane.f32.xlu0 %v1893
        %v1895 = vpop.xlane.xlu0 %1894
        %v1896 = vsel %vm1889, %v1781, -inf
        %1897 = vmax.xlane.f32.xlu0 %v1896
        %v1898 = vpop.xlane.xlu0 %1897
        %v1899 = vsel %vm1889, %v1784, -inf
        %1900 = vmax.xlane.f32.xlu0 %v1899
        %v1901 = vpop.xlane.xlu0 %1900
        %v1902 = vsel %vm1889, %v1828, -inf
        %1903 = vmax.xlane.f32.xlu0 %v1902
        %v1904 = vpop.xlane.xlu0 %1903
        %v1905 = vsel %vm1889, %v1831, -inf
        %1906 = vmax.xlane.f32.xlu0 %v1905
        %v1907 = vpop.xlane.xlu0 %1906
        %v1908 = vsel %vm1889, %v1875, -inf
        %1909 = vmax.xlane.f32.xlu0 %v1908
        %v1910 = vpop.xlane.xlu0 %1909
        %v1911 = vsel %vm1889, %v1878, -inf
        %1912 = vmax.xlane.f32.xlu0 %v1911
        %v1913 = vpop.xlane.xlu0 %1912
        %v1914 = vmax.f32 %v1881, %v1892
        %v1915 = vmax.f32 %v1882, %v1895
        %v1916 = vmax.f32 %v1883, %v1898
        %v1917 = vmax.f32 %v1884, %v1901
        %v1918 = vmax.f32 %v1885, %v1904
        %v1919 = vmax.f32 %v1886, %v1907
        %v1920 = vmax.f32 %v1887, %v1910
        %v1921 = vmax.f32 %v1888, %v1913
        %v1922 = vsub.f32 %v1881, %v1914
        %v1923 = vsub.f32 %v1882, %v1915
        %v1924 = vsub.f32 %v1883, %v1916
        %v1925 = vsub.f32 %v1884, %v1917
        %v1926 = vsub.f32 %v1885, %v1918
        %v1927 = vsub.f32 %v1886, %v1919
        %v1928 = vsub.f32 %v1887, %v1920
        %v1929 = vsub.f32 %v1888, %v1921
        %v1930 = vmul.f32 %v1922, 1.442695
        %v1931 = vpow.pop %v1930
        %v1932 = vmul.f32 %v1923, 1.442695
        %v1933 = vpow.pop %v1932
        %v1934 = vmul.f32 %v1924, 1.442695
        %v1935 = vpow.pop %v1934
        %v1936 = vmul.f32 %v1925, 1.442695
        %v1937 = vpow.pop %v1936
        %v1938 = vmul.f32 %v1926, 1.442695
        %v1939 = vpow.pop %v1938
        %v1940 = vmul.f32 %v1927, 1.442695
        %v1941 = vpow.pop %v1940
        %v1942 = vmul.f32 %v1928, 1.442695
        %v1943 = vpow.pop %v1942
        %v1944 = vmul.f32 %v1929, 1.442695
        %v1945 = vpow.pop %v1944
        %1947 = vset.pattern.permute.xlu0 0
        %1948 = vperm.xlu0 %1947, %v1914
        %v1949 = vpop.permute.xlu0 %1948
        %1952 = vset.pattern.permute.xlu0 0
        %1953 = vperm.xlu0 %1952, %v1915
        %v1954 = vpop.permute.xlu0 %1953
        %1957 = vset.pattern.permute.xlu0 0
        %1958 = vperm.xlu0 %1957, %v1916
        %v1959 = vpop.permute.xlu0 %1958
        %1962 = vset.pattern.permute.xlu0 0
        %1963 = vperm.xlu0 %1962, %v1917
        %v1964 = vpop.permute.xlu0 %1963
        %1967 = vset.pattern.permute.xlu0 0
        %1968 = vperm.xlu0 %1967, %v1918
        %v1969 = vpop.permute.xlu0 %1968
        %1972 = vset.pattern.permute.xlu0 0
        %1973 = vperm.xlu0 %1972, %v1919
        %v1974 = vpop.permute.xlu0 %1973
        %1977 = vset.pattern.permute.xlu0 0
        %1978 = vperm.xlu0 %1977, %v1920
        %v1979 = vpop.permute.xlu0 %1978
        %1982 = vset.pattern.permute.xlu0 0
        %1983 = vperm.xlu0 %1982, %v1921
        %v1984 = vpop.permute.xlu0 %1983
        %v1986 = vsub.f32 %v1734, %v1949
        %v1987 = vsub.f32 %v1737, %v1954
        %v1988 = vsub.f32 %v1781, %v1959
        %v1989 = vsub.f32 %v1784, %v1964
        %v1990 = vsub.f32 %v1828, %v1969
        %v1991 = vsub.f32 %v1831, %v1974
        %v1992 = vsub.f32 %v1875, %v1979
        %v1993 = vsub.f32 %v1878, %v1984
        %v1994 = vmul.f32 %v1986, 1.442695
        %v1995 = vpow.pop %v1994
        %v1996 = vmul.f32 %v1987, 1.442695
        %v1997 = vpow.pop %v1996
        %v1998 = vmul.f32 %v1988, 1.442695
        %v1999 = vpow.pop %v1998
        %v2000 = vmul.f32 %v1989, 1.442695
        %v2001 = vpow.pop %v2000
        %v2002 = vmul.f32 %v1990, 1.442695
        %v2003 = vpow.pop %v2002
        %v2004 = vmul.f32 %v1991, 1.442695
        %v2005 = vpow.pop %v2004
        %v2006 = vmul.f32 %v1992, 1.442695
        %v2007 = vpow.pop %v2006
        %v2008 = vmul.f32 %v1993, 1.442695
        %v2009 = vpow.pop %v2008
        %v2010 = vld [vmem:[#allocation4] sm:$0xff]
        %v2011 = vld [vmem:[#allocation4 + $0x8] sm:$0xff]
        %v2012 = vld [vmem:[#allocation4 + $0x10] sm:$0xff]
        %v2013 = vld [vmem:[#allocation4 + $0x18] sm:$0xff]
        %v2014 = vld [vmem:[#allocation4 + $0x20] sm:$0xff]
        %v2015 = vld [vmem:[#allocation4 + $0x28] sm:$0xff]
        %v2016 = vld [vmem:[#allocation4 + $0x30] sm:$0xff]
        %v2017 = vld [vmem:[#allocation4 + $0x38] sm:$0xff]
        %v2018 = vmul.f32 %v1931, %v2010
        %v2019 = vmul.f32 %v1933, %v2011
        %v2020 = vmul.f32 %v1935, %v2012
        %v2021 = vmul.f32 %v1937, %v2013
        %v2022 = vmul.f32 %v1939, %v2014
        %v2023 = vmul.f32 %v1941, %v2015
        %v2024 = vmul.f32 %v1943, %v2016
        %v2025 = vmul.f32 %v1945, %v2017
        %v2026 = vsel %vm1889, %v1995, 0.0
        %2027 = vadd.xlane.f32.xlu0 %v2026
        %v2028 = vpop.xlane.xlu0 %2027
        %v2029 = vsel %vm1889, %v1997, 0.0
        %2030 = vadd.xlane.f32.xlu0 %v2029
        %v2031 = vpop.xlane.xlu0 %2030
        %v2032 = vsel %vm1889, %v1999, 0.0
        %2033 = vadd.xlane.f32.xlu0 %v2032
        %v2034 = vpop.xlane.xlu0 %2033
        %v2035 = vsel %vm1889, %v2001, 0.0
        %2036 = vadd.xlane.f32.xlu0 %v2035
        %v2037 = vpop.xlane.xlu0 %2036
        %v2038 = vsel %vm1889, %v2003, 0.0
        %2039 = vadd.xlane.f32.xlu0 %v2038
        %v2040 = vpop.xlane.xlu0 %2039
        %v2041 = vsel %vm1889, %v2005, 0.0
        %2042 = vadd.xlane.f32.xlu0 %v2041
        %v2043 = vpop.xlane.xlu0 %2042
        %v2044 = vsel %vm1889, %v2007, 0.0
        %2045 = vadd.xlane.f32.xlu0 %v2044
        %v2046 = vpop.xlane.xlu0 %2045
        %v2047 = vsel %vm1889, %v2009, 0.0
        %2048 = vadd.xlane.f32.xlu0 %v2047
        %v2049 = vpop.xlane.xlu0 %2048
        %v2050 = vadd.f32 %v2018, %v2028
        %v2051 = vadd.f32 %v2019, %v2031
        %v2052 = vadd.f32 %v2020, %v2034
        %v2053 = vadd.f32 %v2021, %v2037
        %v2054 = vadd.f32 %v2022, %v2040
        %v2055 = vadd.f32 %v2023, %v2043
        %v2056 = vadd.f32 %v2024, %v2046
        %v2057 = vadd.f32 %v2025, %v2049
        %vm2058 = vcmask 7168
        %2059 = vst.msk [vmem:[#allocation4] sm:$0xff] %vm2058, %v2050
        %2060 = vst.msk [vmem:[#allocation4 + $0x8] sm:$0xff] %vm2058, %v2051
        %2061 = vst.msk [vmem:[#allocation4 + $0x10] sm:$0xff] %vm2058, %v2052
        %2062 = vst.msk [vmem:[#allocation4 + $0x18] sm:$0xff] %vm2058, %v2053
        %2063 = vst.msk [vmem:[#allocation4 + $0x20] sm:$0xff] %vm2058, %v2054
        %2064 = vst.msk [vmem:[#allocation4 + $0x28] sm:$0xff] %vm2058, %v2055
        %2065 = vst.msk [vmem:[#allocation4 + $0x30] sm:$0xff] %vm2058, %v2056
        %2066 = vst.msk [vmem:[#allocation4 + $0x38] sm:$0xff] %vm2058, %v2057
        %v2067 = vld [vmem:[#allocation5] sm:$0xff]
        %v2068 = vld [vmem:[#allocation5 + $0x8] sm:$0xff]
        %v2069 = vld [vmem:[#allocation5 + $0x10] sm:$0xff]
        %v2070 = vld [vmem:[#allocation5 + $0x18] sm:$0xff]
        %v2071 = vld [vmem:[#allocation5 + $0x20] sm:$0xff]
        %v2072 = vld [vmem:[#allocation5 + $0x28] sm:$0xff]
        %v2073 = vld [vmem:[#allocation5 + $0x30] sm:$0xff]
        %v2074 = vld [vmem:[#allocation5 + $0x38] sm:$0xff]
        %2076 = vset.pattern.permute.xlu0 0
        %2077 = vperm.xlu0 %2076, %v1931
        %v2078 = vpop.permute.xlu0 %2077
        %2081 = vset.pattern.permute.xlu0 0
        %2082 = vperm.xlu0 %2081, %v1933
        %v2083 = vpop.permute.xlu0 %2082
        %2086 = vset.pattern.permute.xlu0 0
        %2087 = vperm.xlu0 %2086, %v1935
        %v2088 = vpop.permute.xlu0 %2087
        %2091 = vset.pattern.permute.xlu0 0
        %2092 = vperm.xlu0 %2091, %v1937
        %v2093 = vpop.permute.xlu0 %2092
        %2096 = vset.pattern.permute.xlu0 0
        %2097 = vperm.xlu0 %2096, %v1939
        %v2098 = vpop.permute.xlu0 %2097
        %2101 = vset.pattern.permute.xlu0 0
        %2102 = vperm.xlu0 %2101, %v1941
        %v2103 = vpop.permute.xlu0 %2102
        %2106 = vset.pattern.permute.xlu0 0
        %2107 = vperm.xlu0 %2106, %v1943
        %v2108 = vpop.permute.xlu0 %2107
        %2111 = vset.pattern.permute.xlu0 0
        %2112 = vperm.xlu0 %2111, %v1945
        %v2113 = vpop.permute.xlu0 %2112
        %v2115 = vmul.f32 %v2078, %v2067
        %v2116 = vmul.f32 %v2083, %v2068
        %v2117 = vmul.f32 %v2088, %v2069
        %v2118 = vmul.f32 %v2093, %v2070
        %v2119 = vmul.f32 %v2098, %v2071
        %v2120 = vmul.f32 %v2103, %v2072
        %v2121 = vmul.f32 %v2108, %v2073
        %v2122 = vmul.f32 %v2113, %v2074
        %v2123 = vpack.c.bf16 %v1997, %v1995
        %v2124 = vpack.c.bf16 %v2001, %v1999
        %v2125 = vpack.c.bf16 %v2005, %v2003
        %v2126 = vpack.c.bf16 %v2009, %v2007
        %v2128 = vsel %vm1889, %v2123, 0
        %2130 = vmatprep.subr.bf16.mxu0 0
        %2131 = vmatpush1.bf16.msra.mxu0 %v1684
        %2132 = vmatprep.subr.bf16.mxu0 0
        %2133 = vmatpush1.bf16.msra.mxu0 0
        %2134 = vmatprep.subr.bf16.mxu0 0
        %2135 = vmatpush1.bf16.msra.mxu0 0
        %2136 = vmatprep.subr.bf16.mxu0 0
        %2137 = vmatpush1.bf16.msra.mxu0 0
        %2138 = vmatprep.subr.bf16.mxu0 0
        %2139 = vmatpush1.bf16.msra.mxu0 0
        %2140 = vmatprep.subr.bf16.mxu0 0
        %2141 = vmatpush1.bf16.msra.mxu0 0
        %2142 = vmatprep.subr.bf16.mxu0 0
        %2143 = vmatpush1.bf16.msra.mxu0 0
        %2144 = vmatprep.subr.bf16.mxu0 0
        %2145 = vmatpush1.bf16.msra.mxu0 0
        %2146 = vmatprep.subr.bf16.mxu0 0
        %2147 = vmatpush1.bf16.msra.mxu0 0
        %2148 = vmatprep.subr.bf16.mxu0 0
        %2149 = vmatpush1.bf16.msra.mxu0 0
        %2150 = vmatprep.subr.bf16.mxu0 0
        %2151 = vmatpush1.bf16.msra.mxu0 0
        %2152 = vmatprep.subr.bf16.mxu0 0
        %2153 = vmatpush1.bf16.msra.mxu0 0
        %2154 = vmatprep.subr.bf16.mxu0 0
        %2155 = vmatpush1.bf16.msra.mxu0 0
        %2156 = vmatprep.subr.bf16.mxu0 0
        %2157 = vmatpush1.bf16.msra.mxu0 0
        %2158 = vmatprep.subr.bf16.mxu0 0
        %2159 = vmatpush1.bf16.msra.mxu0 0
        %2160 = vmatprep.subr.bf16.mxu0 0
        %2161 = vmatpush1.bf16.msra.mxu0 0
        %2162 = vmatprep.mubr.bf16.mxu0 0
        %2163 = vmatmul.mubr.bf16.gmra.mrb[0].mxu0 %v2128
        %v2164 = vpop.f32.mrb[0].mxu0
        %v2165 = vadd.f32 0.0, %v2164
        %v2166 = vpop.f32.mrb[0].mxu0
        %v2167 = vpop.f32.mrb[0].mxu0
        %v2168 = vadd.f32 0.0, %v2167
        %v2169 = vpop.f32.mrb[0].mxu0
        %2170 = vdwg.mxu0
        %v2172 = vsel %vm1889, %v2124, 0
        %2174 = vmatprep.subr.bf16.mxu0 0
        %2175 = vmatpush1.bf16.msra.mxu0 %v1685
        %2176 = vmatprep.subr.bf16.mxu0 0
        %2177 = vmatpush1.bf16.msra.mxu0 0
        %2178 = vmatprep.subr.bf16.mxu0 0
        %2179 = vmatpush1.bf16.msra.mxu0 0
        %2180 = vmatprep.subr.bf16.mxu0 0
        %2181 = vmatpush1.bf16.msra.mxu0 0
        %2182 = vmatprep.subr.bf16.mxu0 0
        %2183 = vmatpush1.bf16.msra.mxu0 0
        %2184 = vmatprep.subr.bf16.mxu0 0
        %2185 = vmatpush1.bf16.msra.mxu0 0
        %2186 = vmatprep.subr.bf16.mxu0 0
        %2187 = vmatpush1.bf16.msra.mxu0 0
        %2188 = vmatprep.subr.bf16.mxu0 0
        %2189 = vmatpush1.bf16.msra.mxu0 0
        %2190 = vmatprep.subr.bf16.mxu0 0
        %2191 = vmatpush1.bf16.msra.mxu0 0
        %2192 = vmatprep.subr.bf16.mxu0 0
        %2193 = vmatpush1.bf16.msra.mxu0 0
        %2194 = vmatprep.subr.bf16.mxu0 0
        %2195 = vmatpush1.bf16.msra.mxu0 0
        %2196 = vmatprep.subr.bf16.mxu0 0
        %2197 = vmatpush1.bf16.msra.mxu0 0
        %2198 = vmatprep.subr.bf16.mxu0 0
        %2199 = vmatpush1.bf16.msra.mxu0 0
        %2200 = vmatprep.subr.bf16.mxu0 0
        %2201 = vmatpush1.bf16.msra.mxu0 0
        %2202 = vmatprep.subr.bf16.mxu0 0
        %2203 = vmatpush1.bf16.msra.mxu0 0
        %2204 = vmatprep.subr.bf16.mxu0 0
        %2205 = vmatpush1.bf16.msra.mxu0 0
        %2206 = vmatprep.mubr.bf16.mxu0 0
        %2207 = vmatmul.mubr.bf16.gmra.mrb[0].mxu0 %v2172
        %v2208 = vpop.f32.mrb[0].mxu0
        %v2209 = vadd.f32 0.0, %v2208
        %v2210 = vpop.f32.mrb[0].mxu0
        %v2211 = vpop.f32.mrb[0].mxu0
        %v2212 = vadd.f32 0.0, %v2211
        %v2213 = vpop.f32.mrb[0].mxu0
        %2214 = vdwg.mxu0
        %v2216 = vsel %vm1889, %v2125, 0
        %2218 = vmatprep.subr.bf16.mxu0 0
        %2219 = vmatpush1.bf16.msra.mxu0 %v1686
        %2220 = vmatprep.subr.bf16.mxu0 0
        %2221 = vmatpush1.bf16.msra.mxu0 0
        %2222 = vmatprep.subr.bf16.mxu0 0
        %2223 = vmatpush1.bf16.msra.mxu0 0
        %2224 = vmatprep.subr.bf16.mxu0 0
        %2225 = vmatpush1.bf16.msra.mxu0 0
        %2226 = vmatprep.subr.bf16.mxu0 0
        %2227 = vmatpush1.bf16.msra.mxu0 0
        %2228 = vmatprep.subr.bf16.mxu0 0
        %2229 = vmatpush1.bf16.msra.mxu0 0
        %2230 = vmatprep.subr.bf16.mxu0 0
        %2231 = vmatpush1.bf16.msra.mxu0 0
        %2232 = vmatprep.subr.bf16.mxu0 0
        %2233 = vmatpush1.bf16.msra.mxu0 0
        %2234 = vmatprep.subr.bf16.mxu0 0
        %2235 = vmatpush1.bf16.msra.mxu0 0
        %2236 = vmatprep.subr.bf16.mxu0 0
        %2237 = vmatpush1.bf16.msra.mxu0 0
        %2238 = vmatprep.subr.bf16.mxu0 0
        %2239 = vmatpush1.bf16.msra.mxu0 0
        %2240 = vmatprep.subr.bf16.mxu0 0
        %2241 = vmatpush1.bf16.msra.mxu0 0
        %2242 = vmatprep.subr.bf16.mxu0 0
        %2243 = vmatpush1.bf16.msra.mxu0 0
        %2244 = vmatprep.subr.bf16.mxu0 0
        %2245 = vmatpush1.bf16.msra.mxu0 0
        %2246 = vmatprep.subr.bf16.mxu0 0
        %2247 = vmatpush1.bf16.msra.mxu0 0
        %2248 = vmatprep.subr.bf16.mxu0 0
        %2249 = vmatpush1.bf16.msra.mxu0 0
        %2250 = vmatprep.mubr.bf16.mxu0 0
        %2251 = vmatmul.mubr.bf16.gmra.mrb[0].mxu0 %v2216
        %v2252 = vpop.f32.mrb[0].mxu0
        %v2253 = vadd.f32 0.0, %v2252
        %v2254 = vpop.f32.mrb[0].mxu0
        %v2255 = vpop.f32.mrb[0].mxu0
        %v2256 = vadd.f32 0.0, %v2255
        %v2257 = vpop.f32.mrb[0].mxu0
        %2258 = vdwg.mxu0
        %v2260 = vsel %vm1889, %v2126, 0
        %2262 = vmatprep.subr.bf16.mxu0 0
        %2263 = vmatpush1.bf16.msra.mxu0 %v1687
        %2264 = vmatprep.subr.bf16.mxu0 0
        %2265 = vmatpush1.bf16.msra.mxu0 0
        %2266 = vmatprep.subr.bf16.mxu0 0
        %2267 = vmatpush1.bf16.msra.mxu0 0
        %2268 = vmatprep.subr.bf16.mxu0 0
        %2269 = vmatpush1.bf16.msra.mxu0 0
        %2270 = vmatprep.subr.bf16.mxu0 0
        %2271 = vmatpush1.bf16.msra.mxu0 0
        %2272 = vmatprep.subr.bf16.mxu0 0
        %2273 = vmatpush1.bf16.msra.mxu0 0
        %2274 = vmatprep.subr.bf16.mxu0 0
        %2275 = vmatpush1.bf16.msra.mxu0 0
        %2276 = vmatprep.subr.bf16.mxu0 0
        %2277 = vmatpush1.bf16.msra.mxu0 0
        %2278 = vmatprep.subr.bf16.mxu0 0
        %2279 = vmatpush1.bf16.msra.mxu0 0
        %2280 = vmatprep.subr.bf16.mxu0 0
        %2281 = vmatpush1.bf16.msra.mxu0 0
        %2282 = vmatprep.subr.bf16.mxu0 0
        %2283 = vmatpush1.bf16.msra.mxu0 0
        %2284 = vmatprep.subr.bf16.mxu0 0
        %2285 = vmatpush1.bf16.msra.mxu0 0
        %2286 = vmatprep.subr.bf16.mxu0 0
        %2287 = vmatpush1.bf16.msra.mxu0 0
        %2288 = vmatprep.subr.bf16.mxu0 0
        %2289 = vmatpush1.bf16.msra.mxu0 0
        %2290 = vmatprep.subr.bf16.mxu0 0
        %2291 = vmatpush1.bf16.msra.mxu0 0
        %2292 = vmatprep.subr.bf16.mxu0 0
        %2293 = vmatpush1.bf16.msra.mxu0 0
        %2294 = vmatprep.mubr.bf16.mxu0 0
        %2295 = vmatmul.mubr.bf16.gmra.mrb[0].mxu0 %v2260
        %v2296 = vpop.f32.mrb[0].mxu0
        %v2297 = vadd.f32 0.0, %v2296
        %v2298 = vpop.f32.mrb[0].mxu0
        %v2299 = vpop.f32.mrb[0].mxu0
        %v2300 = vadd.f32 0.0, %v2299
        %v2301 = vpop.f32.mrb[0].mxu0
        %2302 = vdwg.mxu0
        %v2303 = vadd.f32 %v2115, %v2165
        %v2304 = vadd.f32 %v2116, %v2168
        %v2305 = vadd.f32 %v2117, %v2209
        %v2306 = vadd.f32 %v2118, %v2212
        %v2307 = vadd.f32 %v2119, %v2253
        %v2308 = vadd.f32 %v2120, %v2256
        %v2309 = vadd.f32 %v2121, %v2297
        %v2310 = vadd.f32 %v2122, %v2300
        %2311 = vst.msk [vmem:[#allocation5] sm:$0xff] %vm1692, %v2303
        %2312 = vst.msk [vmem:[#allocation5 + $0x8] sm:$0xff] %vm1692, %v2304
        %2313 = vst.msk [vmem:[#allocation5 + $0x10] sm:$0xff] %vm1692, %v2305
        %2314 = vst.msk [vmem:[#allocation5 + $0x18] sm:$0xff] %vm1692, %v2306
        %2315 = vst.msk [vmem:[#allocation5 + $0x20] sm:$0xff] %vm1692, %v2307
        %2316 = vst.msk [vmem:[#allocation5 + $0x28] sm:$0xff] %vm1692, %v2308
        %2317 = vst.msk [vmem:[#allocation5 + $0x30] sm:$0xff] %vm1692, %v2309
        %2318 = vst.msk [vmem:[#allocation5 + $0x38] sm:$0xff] %vm1692, %v2310
        %2319 = vst.msk [vmem:[#allocation3] sm:$0xff] %vm2058, %v1914
        %2320 = vst.msk [vmem:[#allocation3 + $0x8] sm:$0xff] %vm2058, %v1915
        %2321 = vst.msk [vmem:[#allocation3 + $0x10] sm:$0xff] %vm2058, %v1916
        %2322 = vst.msk [vmem:[#allocation3 + $0x18] sm:$0xff] %vm2058, %v1917
        %2323 = vst.msk [vmem:[#allocation3 + $0x20] sm:$0xff] %vm2058, %v1918
        %2324 = vst.msk [vmem:[#allocation3 + $0x28] sm:$0xff] %vm2058, %v1919
        %2325 = vst.msk [vmem:[#allocation3 + $0x30] sm:$0xff] %vm2058, %v1920
        %2326 = vst.msk [vmem:[#allocation3 + $0x38] sm:$0xff] %vm2058, %v1921
        // Predicated region
        $region77: #{tpu_custom_call.1} parent=47 // pred_check
          %p2327 = pneg %p428
        $region78: #{tpu_custom_call.1} parent=47 // pred_check_branch
          %2329 = sbr.rel (%p2327) target = $region80
        $region79: #{tpu_custom_call.1} parent=47 // pred_region
          %v2330 = vld [vmem:[#allocation5] sm:$0xff]
          %v2331 = vld [vmem:[#allocation5 + $0x8] sm:$0xff]
          %v2332 = vld [vmem:[#allocation5 + $0x10] sm:$0xff]
          %v2333 = vld [vmem:[#allocation5 + $0x18] sm:$0xff]
          %v2334 = vld [vmem:[#allocation5 + $0x20] sm:$0xff]
          %v2335 = vld [vmem:[#allocation5 + $0x28] sm:$0xff]
          %v2336 = vld [vmem:[#allocation5 + $0x30] sm:$0xff]
          %v2337 = vld [vmem:[#allocation5 + $0x38] sm:$0xff]
          %v2338 = vld [vmem:[#allocation4] sm:$0xff]
          %v2339 = vld [vmem:[#allocation4 + $0x8] sm:$0xff]
          %v2340 = vld [vmem:[#allocation4 + $0x10] sm:$0xff]
          %v2341 = vld [vmem:[#allocation4 + $0x18] sm:$0xff]
          %v2342 = vld [vmem:[#allocation4 + $0x20] sm:$0xff]
          %v2343 = vld [vmem:[#allocation4 + $0x28] sm:$0xff]
          %v2344 = vld [vmem:[#allocation4 + $0x30] sm:$0xff]
          %v2345 = vld [vmem:[#allocation4 + $0x38] sm:$0xff]
          %v2346 = vrcp.pop %v2338
          %v2347 = vrcp.pop %v2339
          %v2348 = vrcp.pop %v2340
          %v2349 = vrcp.pop %v2341
          %v2350 = vrcp.pop %v2342
          %v2351 = vrcp.pop %v2343
          %v2352 = vrcp.pop %v2344
          %v2353 = vrcp.pop %v2345
          %2355 = vset.pattern.permute.xlu0 0
          %2356 = vperm.xlu0 %2355, %v2346
          %v2357 = vpop.permute.xlu0 %2356
          %2360 = vset.pattern.permute.xlu0 0
          %2361 = vperm.xlu0 %2360, %v2347
          %v2362 = vpop.permute.xlu0 %2361
          %2365 = vset.pattern.permute.xlu0 0
          %2366 = vperm.xlu0 %2365, %v2348
          %v2367 = vpop.permute.xlu0 %2366
          %2370 = vset.pattern.permute.xlu0 0
          %2371 = vperm.xlu0 %2370, %v2349
          %v2372 = vpop.permute.xlu0 %2371
          %2375 = vset.pattern.permute.xlu0 0
          %2376 = vperm.xlu0 %2375, %v2350
          %v2377 = vpop.permute.xlu0 %2376
          %2380 = vset.pattern.permute.xlu0 0
          %2381 = vperm.xlu0 %2380, %v2351
          %v2382 = vpop.permute.xlu0 %2381
          %2385 = vset.pattern.permute.xlu0 0
          %2386 = vperm.xlu0 %2385, %v2352
          %v2387 = vpop.permute.xlu0 %2386
          %2390 = vset.pattern.permute.xlu0 0
          %2391 = vperm.xlu0 %2390, %v2353
          %v2392 = vpop.permute.xlu0 %2391
          %v2394 = vmul.f32 %v2330, %v2357
          %v2395 = vmul.f32 %v2331, %v2362
          %v2396 = vmul.f32 %v2332, %v2367
          %v2397 = vmul.f32 %v2333, %v2372
          %v2398 = vmul.f32 %v2334, %v2377
          %v2399 = vmul.f32 %v2335, %v2382
          %v2400 = vmul.f32 %v2336, %v2387
          %v2401 = vmul.f32 %v2337, %v2392
          %v2402 = vcombine.low %v2394, %v2398
          %v2403 = vcombine.high %v2394, %v2398
          %v2405 = vunpack.c.l.s4 1983009808
          %v2406 = vunpack.c.0.s8 %v2405
          %v2407 = vlaneseq
          %v2408 = vshrl.u32 %v2407, 7
          %v2409 = vsub.s32 %v2406, %v2408
          %v2410 = vrot.slane %v2402, %v2409
          %v2412 = vunpack.c.l.s4 1983009808
          %v2413 = vunpack.c.0.s8 %v2412
          %v2414 = vlaneseq
          %v2415 = vshrl.u32 %v2414, 7
          %v2416 = vsub.s32 %v2413, %v2415
          %v2417 = vrot.slane %v2403, %v2416
          %v2418 = vcombine.low %v2396, %v2400
          %v2419 = vcombine.high %v2396, %v2400
          %v2421 = vunpack.c.l.s4 1983009808
          %v2422 = vunpack.c.0.s8 %v2421
          %v2423 = vlaneseq
          %v2424 = vshrl.u32 %v2423, 7
          %v2425 = vsub.s32 %v2422, %v2424
          %v2426 = vrot.slane %v2418, %v2425
          %v2428 = vunpack.c.l.s4 1983009808
          %v2429 = vunpack.c.0.s8 %v2428
          %v2430 = vlaneseq
          %v2431 = vshrl.u32 %v2430, 7
          %v2432 = vsub.s32 %v2429, %v2431
          %v2433 = vrot.slane %v2419, %v2432
          %v2434 = vcombine.low %v2410, %v2426
          %v2435 = vcombine.high %v2410, %v2426
          %v2437 = vunpack.c.l.s4 1934713408
          %v2438 = vunpack.c.0.s8 %v2437
          %v2439 = vlaneseq
          %v2440 = vshrl.u32 %v2439, 7
          %v2441 = vsub.s32 %v2438, %v2440
          %v2442 = vrot.slane %v2434, %v2441
          %v2444 = vunpack.c.l.s4 1934713408
          %v2445 = vunpack.c.0.s8 %v2444
          %v2446 = vlaneseq
          %v2447 = vshrl.u32 %v2446, 7
          %v2448 = vsub.s32 %v2445, %v2447
          %v2449 = vrot.slane %v2435, %v2448
          %v2450 = vcombine.low %v2417, %v2433
          %v2451 = vcombine.high %v2417, %v2433
          %v2453 = vunpack.c.l.s4 1934713408
          %v2454 = vunpack.c.0.s8 %v2453
          %v2455 = vlaneseq
          %v2456 = vshrl.u32 %v2455, 7
          %v2457 = vsub.s32 %v2454, %v2456
          %v2458 = vrot.slane %v2450, %v2457
          %v2460 = vunpack.c.l.s4 1934713408
          %v2461 = vunpack.c.0.s8 %v2460
          %v2462 = vlaneseq
          %v2463 = vshrl.u32 %v2462, 7
          %v2464 = vsub.s32 %v2461, %v2463
          %v2465 = vrot.slane %v2451, %v2464
          %v2466 = vcombine.high %v2442, 0.0
          %v2467 = vcombine.high %v2449, 0.0
          %v2468 = vcombine.high %v2458, 0.0
          %v2469 = vcombine.high %v2465, 0.0
          %v2470 = vcombine.low %v2395, %v2399
          %v2471 = vcombine.high %v2395, %v2399
          %v2473 = vunpack.c.l.s4 1983009808
          %v2474 = vunpack.c.0.s8 %v2473
          %v2475 = vlaneseq
          %v2476 = vshrl.u32 %v2475, 7
          %v2477 = vsub.s32 %v2474, %v2476
          %v2478 = vrot.slane %v2470, %v2477
          %v2480 = vunpack.c.l.s4 1983009808
          %v2481 = vunpack.c.0.s8 %v2480
          %v2482 = vlaneseq
          %v2483 = vshrl.u32 %v2482, 7
          %v2484 = vsub.s32 %v2481, %v2483
          %v2485 = vrot.slane %v2471, %v2484
          %v2486 = vcombine.low %v2397, %v2401
          %v2487 = vcombine.high %v2397, %v2401
          %v2489 = vunpack.c.l.s4 1983009808
          %v2490 = vunpack.c.0.s8 %v2489
          %v2491 = vlaneseq
          %v2492 = vshrl.u32 %v2491, 7
          %v2493 = vsub.s32 %v2490, %v2492
          %v2494 = vrot.slane %v2486, %v2493
          %v2496 = vunpack.c.l.s4 1983009808
          %v2497 = vunpack.c.0.s8 %v2496
          %v2498 = vlaneseq
          %v2499 = vshrl.u32 %v2498, 7
          %v2500 = vsub.s32 %v2497, %v2499
          %v2501 = vrot.slane %v2487, %v2500
          %v2502 = vcombine.low %v2478, %v2494
          %v2503 = vcombine.high %v2478, %v2494
          %v2505 = vunpack.c.l.s4 1934713408
          %v2506 = vunpack.c.0.s8 %v2505
          %v2507 = vlaneseq
          %v2508 = vshrl.u32 %v2507, 7
          %v2509 = vsub.s32 %v2506, %v2508
          %v2510 = vrot.slane %v2502, %v2509
          %v2512 = vunpack.c.l.s4 1934713408
          %v2513 = vunpack.c.0.s8 %v2512
          %v2514 = vlaneseq
          %v2515 = vshrl.u32 %v2514, 7
          %v2516 = vsub.s32 %v2513, %v2515
          %v2517 = vrot.slane %v2503, %v2516
          %v2518 = vcombine.low %v2485, %v2501
          %v2519 = vcombine.high %v2485, %v2501
          %v2521 = vunpack.c.l.s4 1934713408
          %v2522 = vunpack.c.0.s8 %v2521
          %v2523 = vlaneseq
          %v2524 = vshrl.u32 %v2523, 7
          %v2525 = vsub.s32 %v2522, %v2524
          %v2526 = vrot.slane %v2518, %v2525
          %v2528 = vunpack.c.l.s4 1934713408
          %v2529 = vunpack.c.0.s8 %v2528
          %v2530 = vlaneseq
          %v2531 = vshrl.u32 %v2530, 7
          %v2532 = vsub.s32 %v2529, %v2531
          %v2533 = vrot.slane %v2519, %v2532
          %v2534 = vcombine.high %v2510, 0.0
          %v2535 = vcombine.high %v2517, 0.0
          %v2536 = vcombine.high %v2526, 0.0
          %v2537 = vcombine.high %v2533, 0.0
          %v2538 = vcombine.low %v2442, %v2449
          %v2540 = vunpack.c.l.s4 1983009808
          %v2541 = vunpack.c.0.s8 %v2540
          %v2542 = vlaneseq
          %v2543 = vshrl.u32 %v2542, 7
          %v2544 = vsub.s32 %v2541, %v2543
          %v2545 = vrot.slane %v2538, %v2544
          %v2546 = vcombine.low %v2466, %v2467
          %v2548 = vunpack.c.l.s4 1983009808
          %v2549 = vunpack.c.0.s8 %v2548
          %v2550 = vlaneseq
          %v2551 = vshrl.u32 %v2550, 7
          %v2552 = vsub.s32 %v2549, %v2551
          %v2553 = vrot.slane %v2546, %v2552
          %v2554 = vcombine.low %v2458, %v2465
          %v2556 = vunpack.c.l.s4 1983009808
          %v2557 = vunpack.c.0.s8 %v2556
          %v2558 = vlaneseq
          %v2559 = vshrl.u32 %v2558, 7
          %v2560 = vsub.s32 %v2557, %v2559
          %v2561 = vrot.slane %v2554, %v2560
          %v2562 = vcombine.low %v2468, %v2469
          %v2564 = vunpack.c.l.s4 1983009808
          %v2565 = vunpack.c.0.s8 %v2564
          %v2566 = vlaneseq
          %v2567 = vshrl.u32 %v2566, 7
          %v2568 = vsub.s32 %v2565, %v2567
          %v2569 = vrot.slane %v2562, %v2568
          %v2570 = vcombine.low %v2545, %v2553
          %v2571 = vcombine.high %v2545, %v2553
          %v2573 = vunpack.c.l.s4 1934713408
          %v2574 = vunpack.c.0.s8 %v2573
          %v2575 = vlaneseq
          %v2576 = vshrl.u32 %v2575, 7
          %v2577 = vsub.s32 %v2574, %v2576
          %v2578 = vrot.slane %v2570, %v2577
          %v2580 = vunpack.c.l.s4 1934713408
          %v2581 = vunpack.c.0.s8 %v2580
          %v2582 = vlaneseq
          %v2583 = vshrl.u32 %v2582, 7
          %v2584 = vsub.s32 %v2581, %v2583
          %v2585 = vrot.slane %v2571, %v2584
          %v2586 = vcombine.low %v2561, %v2569
          %v2587 = vcombine.high %v2561, %v2569
          %v2589 = vunpack.c.l.s4 1934713408
          %v2590 = vunpack.c.0.s8 %v2589
          %v2591 = vlaneseq
          %v2592 = vshrl.u32 %v2591, 7
          %v2593 = vsub.s32 %v2590, %v2592
          %v2594 = vrot.slane %v2586, %v2593
          %v2596 = vunpack.c.l.s4 1934713408
          %v2597 = vunpack.c.0.s8 %v2596
          %v2598 = vlaneseq
          %v2599 = vshrl.u32 %v2598, 7
          %v2600 = vsub.s32 %v2597, %v2599
          %v2601 = vrot.slane %v2587, %v2600
          %v2602 = vcombine.low %v2578, %v2594
          %v2603 = vcombine.high %v2578, %v2594
          %v2604 = vcombine.low %v2585, %v2601
          %v2605 = vcombine.high %v2585, %v2601
          %v2606 = vcombine.low %v2510, %v2517
          %v2608 = vunpack.c.l.s4 1983009808
          %v2609 = vunpack.c.0.s8 %v2608
          %v2610 = vlaneseq
          %v2611 = vshrl.u32 %v2610, 7
          %v2612 = vsub.s32 %v2609, %v2611
          %v2613 = vrot.slane %v2606, %v2612
          %v2614 = vcombine.low %v2534, %v2535
          %v2616 = vunpack.c.l.s4 1983009808
          %v2617 = vunpack.c.0.s8 %v2616
          %v2618 = vlaneseq
          %v2619 = vshrl.u32 %v2618, 7
          %v2620 = vsub.s32 %v2617, %v2619
          %v2621 = vrot.slane %v2614, %v2620
          %v2622 = vcombine.low %v2526, %v2533
          %v2624 = vunpack.c.l.s4 1983009808
          %v2625 = vunpack.c.0.s8 %v2624
          %v2626 = vlaneseq
          %v2627 = vshrl.u32 %v2626, 7
          %v2628 = vsub.s32 %v2625, %v2627
          %v2629 = vrot.slane %v2622, %v2628
          %v2630 = vcombine.low %v2536, %v2537
          %v2632 = vunpack.c.l.s4 1983009808
          %v2633 = vunpack.c.0.s8 %v2632
          %v2634 = vlaneseq
          %v2635 = vshrl.u32 %v2634, 7
          %v2636 = vsub.s32 %v2633, %v2635
          %v2637 = vrot.slane %v2630, %v2636
          %v2638 = vcombine.low %v2613, %v2621
          %v2639 = vcombine.high %v2613, %v2621
          %v2641 = vunpack.c.l.s4 1934713408
          %v2642 = vunpack.c.0.s8 %v2641
          %v2643 = vlaneseq
          %v2644 = vshrl.u32 %v2643, 7
          %v2645 = vsub.s32 %v2642, %v2644
          %v2646 = vrot.slane %v2638, %v2645
          %v2648 = vunpack.c.l.s4 1934713408
          %v2649 = vunpack.c.0.s8 %v2648
          %v2650 = vlaneseq
          %v2651 = vshrl.u32 %v2650, 7
          %v2652 = vsub.s32 %v2649, %v2651
          %v2653 = vrot.slane %v2639, %v2652
          %v2654 = vcombine.low %v2629, %v2637
          %v2655 = vcombine.high %v2629, %v2637
          %v2657 = vunpack.c.l.s4 1934713408
          %v2658 = vunpack.c.0.s8 %v2657
          %v2659 = vlaneseq
          %v2660 = vshrl.u32 %v2659, 7
          %v2661 = vsub.s32 %v2658, %v2660
          %v2662 = vrot.slane %v2654, %v2661
          %v2664 = vunpack.c.l.s4 1934713408
          %v2665 = vunpack.c.0.s8 %v2664
          %v2666 = vlaneseq
          %v2667 = vshrl.u32 %v2666, 7
          %v2668 = vsub.s32 %v2665, %v2667
          %v2669 = vrot.slane %v2655, %v2668
          %v2670 = vcombine.low %v2646, %v2662
          %v2671 = vcombine.high %v2646, %v2662
          %v2672 = vcombine.low %v2653, %v2669
          %v2673 = vcombine.high %v2653, %v2669
          %2676 = vrot.lane.b32.xlu0 %v2603, 32
          %v2677 = vpop.permute.xlu0 %2676
          %2678 = vrot.lane.b32.xlu0 %v2671, 32
          %v2679 = vpop.permute.xlu0 %2678
          %2684 = vrot.lane.b32.xlu0 %v2604, 64
          %v2685 = vpop.permute.xlu0 %2684
          %2686 = vrot.lane.b32.xlu0 %v2672, 64
          %v2687 = vpop.permute.xlu0 %2686
          %2692 = vrot.lane.b32.xlu0 %v2605, 96
          %v2693 = vpop.permute.xlu0 %2692
          %2694 = vrot.lane.b32.xlu0 %v2673, 96
          %v2695 = vpop.permute.xlu0 %2694
          %v2698 = vsel %vm1692, %v2602, %v2677
          %v2699 = vsel %vm1692, %v2670, %v2679
          %vm2700 = vcmask 523264
          %v2701 = vsel %vm2700, %v2698, %v2685
          %v2702 = vsel %vm2700, %v2699, %v2687
          %vm2703 = vcmask 785408
          %v2704 = vsel %vm2703, %v2701, %v2693
          %v2705 = vsel %vm2703, %v2702, %v2695
          %v2706 = vpack.c.bf16 %v2705, %v2704
          %v2707 = vld [vmem:[#allocation15] sm:$0xf]
          %v2708 = vld [vmem:[#allocation15 + $0x4] sm:$0xf]
          %v2709 = vld [vmem:[#allocation15 + $0x8] sm:$0xf]
          %v2710 = vld [vmem:[#allocation15 + $0xc] sm:$0xf]
          %v2711 = vld [vmem:[#allocation15 + $0x10] sm:$0xf]
          %v2712 = vld [vmem:[#allocation15 + $0x14] sm:$0xf]
          %v2713 = vld [vmem:[#allocation15 + $0x18] sm:$0xf]
          %v2714 = vld [vmem:[#allocation15 + $0x1c] sm:$0xf]
          %v2715 = vld [vmem:[#allocation15 + $0x20] sm:$0xf]
          %v2716 = vld [vmem:[#allocation15 + $0x24] sm:$0xf]
          %v2717 = vld [vmem:[#allocation15 + $0x28] sm:$0xf]
          %v2718 = vld [vmem:[#allocation15 + $0x2c] sm:$0xf]
          %v2719 = vld [vmem:[#allocation15 + $0x30] sm:$0xf]
          %v2720 = vld [vmem:[#allocation15 + $0x34] sm:$0xf]
          %v2721 = vld [vmem:[#allocation15 + $0x38] sm:$0xf]
          %v2722 = vld [vmem:[#allocation15 + $0x3c] sm:$0xf]
          %v2723 = vld [vmem:[%s6 + $0x3] sm:$0x1]
          %v2724 = vlaneseq
          %v2725 = vshrl.u32 %v2724, 7
          %v2726 = vsub.s32 0, %v2725
          %v2727 = vrot.slane %v2723, %v2726
          %v2744 = vunpack.c.l.b16 %v2707
          %v2745 = vunpack.c.l.b16 %v2708
          %v2746 = vunpack.c.l.b16 %v2709
          %v2747 = vunpack.c.l.b16 %v2710
          %v2748 = vunpack.c.l.b16 %v2711
          %v2749 = vunpack.c.l.b16 %v2712
          %v2750 = vunpack.c.l.b16 %v2713
          %v2751 = vunpack.c.l.b16 %v2714
          %v2752 = vunpack.c.l.b16 %v2715
          %v2753 = vunpack.c.l.b16 %v2716
          %v2754 = vunpack.c.l.b16 %v2717
          %v2755 = vunpack.c.l.b16 %v2718
          %v2756 = vunpack.c.l.b16 %v2719
          %v2757 = vunpack.c.l.b16 %v2720
          %v2758 = vunpack.c.l.b16 %v2721
          %v2759 = vunpack.c.l.b16 %v2722
          %v2760 = vpack.c.b16 %v2745, %v2744
          %v2761 = vpack.c.b16 %v2747, %v2746
          %v2762 = vpack.c.b16 %v2749, %v2748
          %v2763 = vpack.c.b16 %v2751, %v2750
          %v2764 = vpack.c.b16 %v2753, %v2752
          %v2765 = vpack.c.b16 %v2755, %v2754
          %v2766 = vpack.c.b16 %v2757, %v2756
          %v2767 = vpack.c.b16 %v2759, %v2758
          %2776 = vmatprep.subr.bf16.mxu0 0
          %2777 = vmatpush1.bf16.msra.mxu0 %v2760
          %2778 = vmatprep.subr.bf16.mxu0 0
          %2779 = vmatpush1.bf16.msra.mxu0 %v2761
          %2780 = vmatprep.subr.bf16.mxu0 0
          %2781 = vmatpush1.bf16.msra.mxu0 %v2762
          %2782 = vmatprep.subr.bf16.mxu0 0
          %2783 = vmatpush1.bf16.msra.mxu0 %v2763
          %2784 = vmatprep.subr.bf16.mxu0 0
          %2785 = vmatpush1.bf16.msra.mxu0 %v2764
          %2786 = vmatprep.subr.bf16.mxu0 0
          %2787 = vmatpush1.bf16.msra.mxu0 %v2765
          %2788 = vmatprep.subr.bf16.mxu0 0
          %2789 = vmatpush1.bf16.msra.mxu0 %v2766
          %2790 = vmatprep.subr.bf16.mxu0 0
          %2791 = vmatpush1.bf16.msra.mxu0 %v2767
          %2792 = vmatprep.subr.bf16.mxu0 0
          %2793 = vmatpush1.bf16.msra.mxu0 0
          %2794 = vmatprep.subr.bf16.mxu0 0
          %2795 = vmatpush1.bf16.msra.mxu0 0
          %2796 = vmatprep.subr.bf16.mxu0 0
          %2797 = vmatpush1.bf16.msra.mxu0 0
          %2798 = vmatprep.subr.bf16.mxu0 0
          %2799 = vmatpush1.bf16.msra.mxu0 0
          %2800 = vmatprep.subr.bf16.mxu0 0
          %2801 = vmatpush1.bf16.msra.mxu0 0
          %2802 = vmatprep.subr.bf16.mxu0 0
          %2803 = vmatpush1.bf16.msra.mxu0 0
          %2804 = vmatprep.subr.bf16.mxu0 0
          %2805 = vmatpush1.bf16.msra.mxu0 0
          %2806 = vmatprep.subr.bf16.mxu0 0
          %2807 = vmatpush1.bf16.msra.mxu0 0
          %2808 = vmatprep.mubr.bf16.mxu0 0
          %2809 = vmatmul.mubr.bf16.gmra.mrb[0].mxu0 %v2706
          %v2810 = vpop.f32.mrb[0].mxu0
          %v2811 = vadd.f32 %v2727, %v2810
          %v2812 = vpop.f32.mrb[0].mxu0
          %v2813 = vpop.f32.mrb[0].mxu0
          %v2814 = vadd.f32 %v2727, %v2813
          %v2815 = vpop.f32.mrb[0].mxu0
          %2816 = vdwg.mxu0
          %2817 = vst [vmem:[%s423] sm:$0xff] %v2811
          %2818 = vst [vmem:[%s423 + $0x8] sm:$0xff] %v2814
        $region80: #{tpu_custom_call.1} parent=47 // pred_fallthru
          _
        %s2819 = sand.u32 %s219, 1
        %s2820 = scalar_lea.sflag [#allocation8], %s2819
        %s2821 = sand.u32 %s219, 1
        %s2822 = smul.addr %s2821, 16
        %s2823 = scalar_lea.vmem [#allocation17], %s2822
        // Predicated region
        $region81: #{tpu_custom_call.1} parent=47 // pred_check
          %p2824 = pneg %p229
        $region82: #{tpu_custom_call.1} parent=47 // pred_check_branch
          %2826 = sbr.rel (%p2824) target = $region84
        $region83: #{tpu_custom_call.1} parent=47 // pred_region
          %s2827 = smul.u32 2, %s35
          %s2829 = ssub.s32 256, 256
          %2830 = vsyncadd %s2820, %s2829
          %s2831 = smul.addr %s34, 2
          %s2832 = sadd.s32 %s2827, %s2831
          %s2833 = smul.addr %s2832, 128
          %s2834 = scalar_lea.hbm %s7, %s2833
          %s2835 = sshll.u32 %s2823, 4
          %s2836 = int_to_ptr.vmem [resolvable:$true] %s2835
          %2841 = dma.vmem_to_hbm [thread:$0]  %s2836, 256, %s2834, %s2820, 128, 128, 8
        $region84: #{tpu_custom_call.1} parent=47 // pred_fallthru
          _
      $region48: #{tpu_custom_call.1} parent=5 // pred_fallthru
        _
      %p2842 = scmp.le.s32.totalorder 2, %s24
      // Predicated region
      $region85: #{tpu_custom_call.1} parent=5 // pred_check
        %p2843 = pneg %p2842
      $region86: #{tpu_custom_call.1} parent=5 // pred_check_branch
        %2845 = sbr.rel (%p2843) target = $region88
      $region87: #{tpu_custom_call.1} parent=5 // pred_region
        %s2846 = ssub.s32 %s24, 2
        // Predicated region
        $region89: #{tpu_custom_call.1} parent=87 // pred_check
          %p2847 = pneg %p235
        $region90: #{tpu_custom_call.1} parent=87 // pred_check_branch
          %2849 = sbr.rel (%p2847) target = $region92
        $region91: #{tpu_custom_call.1} parent=87 // pred_region
          %s2850 = sand.u32 %s220, 1
          %s2851 = scalar_lea.sflag [#allocation8], %s2850
          %s2852 = sand.u32 %s220, 1
          %s2853 = smul.addr %s2852, 16
          %s2854 = scalar_lea.vmem [#allocation17], %s2853
          %2855 = dma.done %s2851, 256
        $region92: #{tpu_custom_call.1} parent=87 // pred_fallthru
          _
      $region88: #{tpu_custom_call.1} parent=5 // pred_fallthru
        _
    $region6: #{tpu_custom_call.1} parent=1 // loop_footer
      %s28 = sadd.s32 1, %s24
    $region7: #{tpu_custom_call.1} parent=1 // loop_footer_branch
      %23 = sbr.rel target = $region3
    $region8: #{tpu_custom_call.1} parent=1 // loop_exit
      _
    %2856 = vsyncpa [#allocation7], 1
    %s2857 = scalar_lea.sflag [#allocation7], 1
    %2858 = vsyncpa %s2857, 1
    %2859 = vsyncpa [#allocation10], 1
    %s2860 = scalar_lea.sflag [#allocation10], 1
    %2861 = vsyncpa %s2860, 1
    %2862 = vsyncpa [#allocation13], 1
    %2863 = vsyncpa [#allocation16], 1
    %2864 = vsyncpa [#allocation8], 1
    %s2865 = scalar_lea.sflag [#allocation8], 1
    %2866 = vsyncpa %s2865, 1

</llo_original>
